<compile_context>
chip_gen: v5e
topology: v5e:2x2
jax: 0.10.0
libtpu: 0.0.40
codegen_flags: <defaults>
</compile_context>

<pallas_src>
import functools
import math

import jax
import jax.numpy as jnp
from jax import lax
from jax.experimental import pallas as pl
from jax.experimental.pallas import tpu as pltpu

# Flip to jnp.bfloat16 only once N/H are large enough that the matmuls dominate
# (keeps f32 accumulation via preferred_element_type); at N=32 the kernel is
# overhead-bound and f32 keeps exact parity with the torch reference.
MATMUL_DTYPE = jnp.float32


def _mm(a, b, dt):
    """MXU matmul with optional reduced-precision operands, f32 accumulation."""
    return jnp.dot(a.astype(dt), b.astype(dt), preferred_element_type=jnp.float32)


# ----------------------------------------------------------------------------
# Fully fused forward kernel.
#   refs layout: x, adj,
#                per conv layer : one slab (f_in + 8, 4H)
#                    rows [0:f_in]      = [Wq | Wk | Wv | Wskip]
#                    row  f_in          = concatenated bias (1, 4H)
#                    row  f_in+1 [:H]   = wb_a  (= wb_msg + wb_diff)
#                    row  f_in+2 [:H]   = wb_b  (= wb_skip - wb_diff)
#                    row  f_in+3 [:H]   = LayerNorm gamma
#                    row  f_in+4 [:H]   = LayerNorm beta
#                per MLP layer  : one slab (fan_in + 8, fan_out)
#                    rows [0:fan_in] = W, row fan_in = bias
#                out_ref last.
# ----------------------------------------------------------------------------
def _gnn_fused_kernel(*refs, n_convs, conv_f_ins, hidden_dim, mlp_fan_ins,
                      mlp_relu_flags, matmul_dtype):
    x_ref, adj_ref = refs[0], refs[1]
    o_ref = refs[-1]
    conv_refs = refs[2:2 + n_convs]
    mlp_refs = refs[2 + n_convs:-1]

    H = hidden_dim
    h = x_ref[...]
    adj = adj_ref[...]                 # edge multiplicity counts (>= 0)
    neg = jnp.float32(-1e30)
    scale = 1.0 / math.sqrt(H)

    for li in range(n_convs):
        f_in = conv_f_ins[li]
        slab = conv_refs[li][...]      # single load per layer
        w_all = slab[:f_in, :]         # (f_in, 4H)
        tail = slab[f_in:f_in + 8, :]  # sublane-aligned 8-row tail
        b_all = tail[0:1, :]           # (1, 4H)
        wb_a = tail[1:2, :H]           # (1, H)
        wb_b = tail[2:3, :H]
        gamma = tail[3:4, :H]
        beta_ln = tail[4:5, :H]

        # single lane-dense 4H-wide projection, then slice q/k/v/x_r
        proj = _mm(h, w_all, matmul_dtype) + b_all
        # TODO(synk): confirm via pl.lower_as_mlir that these static lane-offset
        # slices (0/H/2H/3H of a 4H-lane row) lower without relayout copies; if
        # they do, fall back to four H-wide matmuls.
        q = proj[:, 0 * H:1 * H]
        k = proj[:, 1 * H:2 * H]
        v = proj[:, 2 * H:3 * H]
        x_r = proj[:, 3 * H:4 * H]

        # scores[i, j] = (q_i . k_j) / sqrt(C)  (contract last axes, no k.T)
        scores = lax.dot_general(
            q, k, dimension_numbers=(((1,), (1,)), ((), ())),
            preferred_element_type=jnp.float32) * scale

        row_max = jnp.max(jnp.where(adj > 0.0, scores, neg),
                          axis=-1, keepdims=True)
        # rows with no incoming edges: keep the max finite
        row_max = jnp.where(row_max <= neg * 0.5, 0.0, row_max)
        # exp weighted by edge multiplicity => exact PyG scatter-softmax with
        # duplicate edges; adj==0 zeroes non-edges, clamp keeps it NaN-safe.
        p = jnp.exp(jnp.minimum(scores - row_max, 60.0)) * adj
        denom = jnp.sum(p, axis=-1, keepdims=True)
        inv = pl.reciprocal(jnp.where(denom == 0.0, 1.0, denom), approx=True)
        alpha = p * inv

        # TODO(synk): attention-weight dropout of TransformerConv omitted (eval mode)
        msg = _mm(alpha, v, matmul_dtype)

        # folded beta gate: beta_logit = <msg, wb_msg> + <x_r, wb_skip> + <msg - x_r, wb_diff>
        beta_logit = jnp.sum(msg * wb_a + x_r * wb_b, axis=-1, keepdims=True)
        g = jax.nn.sigmoid(beta_logit)
        out = g * x_r + (1.0 - g) * msg

        # LayerNorm -> ReLU -> Dropout(eval identity) [-> + residual for li>0]
        mean = jnp.mean(out, axis=-1, keepdims=True)
        var = jnp.mean((out - mean) ** 2, axis=-1, keepdims=True)
        y = (out - mean) * lax.rsqrt(var + 1e-5) * gamma + beta_ln
        y = jnp.maximum(y, 0.0)
        # TODO(synk): F.dropout omitted (module evaluated in eval mode => identity)
        if li > 0:
            y = y + h                  # residual from previous block output
        h = y

    # MLP head, all intermediates stay in vregs/VMEM
    for i, relu_flag in enumerate(mlp_relu_flags):
        fi = mlp_fan_ins[i]
        wb = mlp_refs[i][...]
        h = _mm(h, wb[:fi, :], matmul_dtype) + wb[fi:fi + 1, :]
        if relu_flag:
            h = jnp.maximum(h, 0.0)

    o_ref[...] = h


def gnn_forward(params, x, adj):
    n = x.shape[0]
    out_dim = params["out_dim"]

    flat = [x, adj] + list(params["conv_slabs"]) + list(params["mlp_wbs"])

    kernel = functools.partial(
        _gnn_fused_kernel,
        n_convs=len(params["conv_slabs"]),
        conv_f_ins=tuple(params["conv_f_ins"]),
        hidden_dim=params["hidden_dim"],
        mlp_fan_ins=tuple(params["mlp_fan_ins"]),
        mlp_relu_flags=tuple(params["mlp_relu_flags"]),
        matmul_dtype=MATMUL_DTYPE)

    out = pl.pallas_call(
        kernel,
        out_shape=jax.ShapeDtypeStruct((n, out_dim), jnp.float32),
        in_specs=[pl.BlockSpec(memory_space=pltpu.MemorySpace.VMEM)
                  for _ in range(len(flat))],
        out_specs=pl.BlockSpec(memory_space=pltpu.MemorySpace.VMEM),
    )(*flat)
    return out.reshape(n, out_dim, 1)


# ----------------------------------------------------------------------------
# Parameter construction (deterministic, synthetic), packed into slabs.
# ----------------------------------------------------------------------------
def init_params(key, input_dim, hidden_dim, output_dim, num_layers,
                num_linear_layers):
    H = hidden_dim

    def dense(k, fan_in, fan_out):
        s = 1.0 / math.sqrt(fan_in)
        kw, kb = jax.random.split(k)
        w = jax.random.uniform(kw, (fan_in, fan_out), jnp.float32, -s, s)
        b = jax.random.uniform(kb, (fan_out,), jnp.float32, -s, s)
        return w, b

    params = {"conv_slabs": [], "conv_f_ins": [], "mlp_wbs": [],
              "mlp_fan_ins": [], "mlp_relu_flags": [],
              "hidden_dim": H, "out_dim": output_dim}

    n_convs = num_layers - 1
    for li in range(n_convs):
        f_in = input_dim if li == 0 else H
        key, k1, k2, k3, k4, k5 = jax.random.split(key, 6)
        wq, bq = dense(k1, f_in, H)
        wk, bk = dense(k2, f_in, H)
        wv, bv = dense(k3, f_in, H)
        ws, bs = dense(k4, f_in, H)
        # concatenated [Wq | Wk | Wv | Wskip] -> one 4H-wide lane-dense matmul
        w_all = jnp.concatenate([wq, wk, wv, ws], axis=1)   # (f_in, 4H)
        b_all = jnp.concatenate([bq, bk, bv, bs], axis=0)   # (4H,)

        # lin_beta: Linear(3H, 1, bias=False) — fold for the VPU lane-reduction
        s3 = 1.0 / math.sqrt(3 * H)
        wb = jax.random.uniform(k5, (3 * H,), jnp.float32, -s3, s3)
        wb_msg, wb_skip, wb_diff = wb[:H], wb[H:2 * H], wb[2 * H:]
        wb_a = wb_msg + wb_diff      # multiplies msg
        wb_b = wb_skip - wb_diff     # multiplies x_r

        gamma = jnp.ones((H,), jnp.float32)       # torch LayerNorm default init
        beta_ln = jnp.zeros((H,), jnp.float32)

        slab = jnp.zeros((f_in + 8, 4 * H), jnp.float32)
        slab = slab.at[:f_in, :].set(w_all)
        slab = slab.at[f_in, :].set(b_all)
        slab = slab.at[f_in + 1, :H].set(wb_a)
        slab = slab.at[f_in + 2, :H].set(wb_b)
        slab = slab.at[f_in + 3, :H].set(gamma)
        slab = slab.at[f_in + 4, :H].set(beta_ln)
        params["conv_slabs"].append(slab)
        params["conv_f_ins"].append(f_in)

    # MLP head: Linear(H, 2H) ReLU [Linear(2H,2H) ReLU]* Linear(2H, out)
    dims = [H, 2 * H] + [2 * H] * (num_linear_layers - 2) + [output_dim]
    for i in range(len(dims) - 1):
        key, k = jax.random.split(key)
        w, b = dense(k, dims[i], dims[i + 1])
        wb_slab = jnp.zeros((dims[i] + 8, dims[i + 1]), jnp.float32)
        wb_slab = wb_slab.at[:dims[i], :].set(w)
        wb_slab = wb_slab.at[dims[i], :].set(b)
        params["mlp_wbs"].append(wb_slab)
        params["mlp_fan_ins"].append(dims[i])
        params["mlp_relu_flags"].append(i < len(dims) - 2)  # ReLU on all but last
    return params


# ----------------------------------------------------------------------------
if __name__ == "__main__":
    # Small, module-consistent shapes
    N = 32                 # number of nodes
    E = 96                 # number of edges
    INPUT_DIM = 16
    HIDDEN_DIM = 32
    OUTPUT_DIM = 8
    NUM_LAYERS = 3         # -> 2 TransformerConv layers, 2 LayerNorms
    NUM_LINEAR_LAYERS = 3  # Linear(H,2H) ReLU Linear(2H,2H) ReLU Linear(2H,out)

    key = jax.random.PRNGKey(0)
    k_x, k_src, k_dst, k_p = jax.random.split(key, 4)

    x = jax.random.normal(k_x, (N, INPUT_DIM), jnp.float32)
    src = jax.random.randint(k_src, (E,), 0, N)
    dst = jax.random.randint(k_dst, (E,), 0, N)
    # edge_index = jnp.stack([src, dst])  (PyG: row 0 = source j, row 1 = target i)
    # dense adjacency with MULTIPLICITY: adj[i, j] = #edges j -> i, so duplicate
    # edges are counted exactly like PyG's scatter-softmax.
    adj = jnp.zeros((N, N), jnp.float32).at[dst, src].add(1.0)

    params = init_params(k_p, INPUT_DIM, HIDDEN_DIM, OUTPUT_DIM,
                         NUM_LAYERS, NUM_LINEAR_LAYERS)

    out = gnn_forward(params, x, adj)
    out = jax.block_until_ready(out)
    assert out.shape == (N, OUTPUT_DIM, 1)
    assert bool(jnp.all(jnp.isfinite(out)))
    print("KERNEL_OK")
</pallas_src>

<mosaic_0001>
module attributes {stable_mosaic.version = 11 : i64} {
  func.func @_gnn_fused_kernel(%arg0: memref<32x16xf32, #tpu.memory_space<vmem>>, %arg1: memref<32x32xf32, #tpu.memory_space<vmem>>, %arg2: memref<24x128xf32, #tpu.memory_space<vmem>>, %arg3: memref<40x128xf32, #tpu.memory_space<vmem>>, %arg4: memref<40x64xf32, #tpu.memory_space<vmem>>, %arg5: memref<72x64xf32, #tpu.memory_space<vmem>>, %arg6: memref<72x8xf32, #tpu.memory_space<vmem>>, %arg7: memref<32x8xf32, #tpu.memory_space<vmem>>) attributes {dimension_semantics = [], scalar_prefetch = 0 : i64, scratch_operands = 0 : i64, tpu.core_type = #tpu.core_type<tc>} {
    %c0 = arith.constant 0 : index
    %c0_0 = arith.constant 0 : index
    %0 = vector.load %arg0[%c0, %c0_0] : memref<32x16xf32, #tpu.memory_space<vmem>>, vector<32x16xf32>
    %c0_1 = arith.constant 0 : index
    %c0_2 = arith.constant 0 : index
    %1 = vector.load %arg1[%c0_1, %c0_2] : memref<32x32xf32, #tpu.memory_space<vmem>>, vector<32x32xf32>
    %c0_3 = arith.constant 0 : index
    %c0_4 = arith.constant 0 : index
    %2 = vector.load %arg2[%c0_3, %c0_4] : memref<24x128xf32, #tpu.memory_space<vmem>>, vector<24x128xf32>
    %3 = vector.extract_strided_slice %2 {offsets = [0, 0], sizes = [16, 128], strides = [1, 1]} : vector<24x128xf32> to vector<16x128xf32>
    %4 = vector.extract_strided_slice %2 {offsets = [16, 0], sizes = [8, 128], strides = [1, 1]} : vector<24x128xf32> to vector<8x128xf32>
    %5 = vector.extract_strided_slice %4 {offsets = [0, 0], sizes = [1, 128], strides = [1, 1]} : vector<8x128xf32> to vector<1x128xf32>
    %6 = vector.extract_strided_slice %4 {offsets = [1, 0], sizes = [1, 32], strides = [1, 1]} : vector<8x128xf32> to vector<1x32xf32>
    %7 = vector.extract_strided_slice %4 {offsets = [2, 0], sizes = [1, 32], strides = [1, 1]} : vector<8x128xf32> to vector<1x32xf32>
    %8 = vector.extract_strided_slice %4 {offsets = [3, 0], sizes = [1, 32], strides = [1, 1]} : vector<8x128xf32> to vector<1x32xf32>
    %9 = vector.extract_strided_slice %4 {offsets = [4, 0], sizes = [1, 32], strides = [1, 1]} : vector<8x128xf32> to vector<1x32xf32>
    %cst = arith.constant dense<0.000000e+00> : vector<32x128xf32>
    %10 = tpu.matmul %0, %3, %cst {dimension_numbers = #tpu.dot_dimension_numbers<[1], [0], [0], [1], [0, 0, 1, 1], [], []>} : vector<32x16xf32>, vector<16x128xf32>, vector<32x128xf32> -> vector<32x128xf32>
    %11 = vector.broadcast %5 : vector<1x128xf32> to vector<32x128xf32>
    %12 = arith.addf %10, %11 : vector<32x128xf32>
    %13 = vector.extract_strided_slice %12 {offsets = [0, 0], sizes = [32, 32], strides = [1, 1]} : vector<32x128xf32> to vector<32x32xf32>
    %14 = vector.extract_strided_slice %12 {offsets = [0, 32], sizes = [32, 32], strides = [1, 1]} : vector<32x128xf32> to vector<32x32xf32>
    %15 = vector.extract_strided_slice %12 {offsets = [0, 64], sizes = [32, 32], strides = [1, 1]} : vector<32x128xf32> to vector<32x32xf32>
    %16 = vector.extract_strided_slice %12 {offsets = [0, 96], sizes = [32, 32], strides = [1, 1]} : vector<32x128xf32> to vector<32x32xf32>
    %cst_5 = arith.constant dense<0.000000e+00> : vector<32x32xf32>
    %17 = tpu.matmul %13, %14, %cst_5 {dimension_numbers = #tpu.dot_dimension_numbers<[1], [1], [0], [0], [0, 0, 1, 0], [], []>} : vector<32x32xf32>, vector<32x32xf32>, vector<32x32xf32> -> vector<32x32xf32>
    %cst_6 = arith.constant 0.176776692 : f32
    %18 = vector.broadcast %cst_6 : f32 to vector<32x32xf32>
    %19 = arith.mulf %17, %18 : vector<32x32xf32>
    %cst_7 = arith.constant 0.000000e+00 : f32
    %20 = vector.broadcast %cst_7 : f32 to vector<32x32xf32>
    %21 = arith.cmpf ogt, %1, %20 : vector<32x32xf32>
    %cst_8 = arith.constant -1.000000e+30 : f32
    %22 = vector.broadcast %cst_8 : f32 to vector<32x32xf32>
    %23 = arith.select %21, %19, %22 : vector<32x32xi1>, vector<32x32xf32>
    %cst_9 = arith.constant dense<0xFF800000> : vector<32xf32>
    %24 = vector.multi_reduction <maximumf>, %23, %cst_9 [1] : vector<32x32xf32> to vector<32xf32>
    %25 = vector.shape_cast %24 : vector<32xf32> to vector<32x1xf32>
    %cst_10 = arith.constant -1.000000e+30 : f32
    %cst_11 = arith.constant 5.000000e-01 : f32
    %26 = arith.mulf %cst_10, %cst_11 : f32
    %27 = vector.broadcast %26 : f32 to vector<32x1xf32>
    %28 = arith.cmpf ole, %25, %27 : vector<32x1xf32>
    %cst_12 = arith.constant 0.000000e+00 : f32
    %29 = vector.broadcast %cst_12 : f32 to vector<32x1xf32>
    %30 = arith.select %28, %29, %25 : vector<32x1xi1>, vector<32x1xf32>
    %31 = vector.broadcast %30 : vector<32x1xf32> to vector<32x32xf32>
    %32 = arith.subf %19, %31 : vector<32x32xf32>
    %cst_13 = arith.constant 6.000000e+01 : f32
    %33 = vector.broadcast %cst_13 : f32 to vector<32x32xf32>
    %34 = arith.minimumf %32, %33 : vector<32x32xf32>
    %35 = math.exp %34 : vector<32x32xf32>
    %36 = arith.mulf %35, %1 : vector<32x32xf32>
    %cst_14 = arith.constant dense<0.000000e+00> : vector<32xf32>
    %37 = vector.multi_reduction <add>, %36, %cst_14 [1] : vector<32x32xf32> to vector<32xf32>
    %38 = vector.shape_cast %37 : vector<32xf32> to vector<32x1xf32>
    %cst_15 = arith.constant 0.000000e+00 : f32
    %39 = vector.broadcast %cst_15 : f32 to vector<32x1xf32>
    %40 = arith.cmpf oeq, %38, %39 : vector<32x1xf32>
    %cst_16 = arith.constant 1.000000e+00 : f32
    %41 = vector.broadcast %cst_16 : f32 to vector<32x1xf32>
    %42 = arith.select %40, %41, %38 : vector<32x1xi1>, vector<32x1xf32>
    %43 = tpu.reciprocal %42 {approx = true} : vector<32x1xf32> -> vector<32x1xf32>
    %44 = vector.broadcast %43 : vector<32x1xf32> to vector<32x32xf32>
    %45 = arith.mulf %36, %44 : vector<32x32xf32>
    %cst_17 = arith.constant dense<0.000000e+00> : vector<32x32xf32>
    %46 = tpu.matmul %45, %15, %cst_17 {dimension_numbers = #tpu.dot_dimension_numbers<[1], [0], [0], [1], [0, 0, 1, 1], [], []>} : vector<32x32xf32>, vector<32x32xf32>, vector<32x32xf32> -> vector<32x32xf32>
    %47 = vector.broadcast %6 : vector<1x32xf32> to vector<32x32xf32>
    %48 = arith.mulf %46, %47 : vector<32x32xf32>
    %49 = vector.broadcast %7 : vector<1x32xf32> to vector<32x32xf32>
    %50 = arith.mulf %16, %49 : vector<32x32xf32>
    %51 = arith.addf %48, %50 : vector<32x32xf32>
    %cst_18 = arith.constant dense<0.000000e+00> : vector<32xf32>
    %52 = vector.multi_reduction <add>, %51, %cst_18 [1] : vector<32x32xf32> to vector<32xf32>
    %53 = vector.shape_cast %52 : vector<32xf32> to vector<32x1xf32>
    %54 = arith.negf %53 : vector<32x1xf32>
    %55 = math.exp %54 : vector<32x1xf32>
    %cst_19 = arith.constant 1.000000e+00 : f32
    %56 = vector.broadcast %cst_19 : f32 to vector<32x1xf32>
    %57 = arith.addf %56, %55 : vector<32x1xf32>
    %58 = arith.divf %56, %57 : vector<32x1xf32>
    %59 = vector.broadcast %58 : vector<32x1xf32> to vector<32x32xf32>
    %60 = arith.mulf %59, %16 : vector<32x32xf32>
    %cst_20 = arith.constant 1.000000e+00 : f32
    %61 = vector.broadcast %cst_20 : f32 to vector<32x1xf32>
    %62 = arith.subf %61, %58 : vector<32x1xf32>
    %63 = vector.broadcast %62 : vector<32x1xf32> to vector<32x32xf32>
    %64 = arith.mulf %63, %46 : vector<32x32xf32>
    %65 = arith.addf %60, %64 : vector<32x32xf32>
    %cst_21 = arith.constant dense<0.000000e+00> : vector<32xf32>
    %66 = vector.multi_reduction <add>, %65, %cst_21 [1] : vector<32x32xf32> to vector<32xf32>
    %67 = vector.shape_cast %66 : vector<32xf32> to vector<32x1xf32>
    %cst_22 = arith.constant 3.200000e+01 : f32
    %68 = vector.broadcast %cst_22 : f32 to vector<32x1xf32>
    %69 = arith.divf %67, %68 : vector<32x1xf32>
    %70 = vector.broadcast %69 : vector<32x1xf32> to vector<32x32xf32>
    %71 = arith.subf %65, %70 : vector<32x32xf32>
    %72 = arith.mulf %71, %71 : vector<32x32xf32>
    %cst_23 = arith.constant dense<0.000000e+00> : vector<32xf32>
    %73 = vector.multi_reduction <add>, %72, %cst_23 [1] : vector<32x32xf32> to vector<32xf32>
    %74 = vector.shape_cast %73 : vector<32xf32> to vector<32x1xf32>
    %cst_24 = arith.constant 3.200000e+01 : f32
    %75 = vector.broadcast %cst_24 : f32 to vector<32x1xf32>
    %76 = arith.divf %74, %75 : vector<32x1xf32>
    %77 = vector.broadcast %69 : vector<32x1xf32> to vector<32x32xf32>
    %78 = arith.subf %65, %77 : vector<32x32xf32>
    %cst_25 = arith.constant 9.99999974E-6 : f32
    %79 = vector.broadcast %cst_25 : f32 to vector<32x1xf32>
    %80 = arith.addf %76, %79 : vector<32x1xf32>
    %81 = math.rsqrt %80 : vector<32x1xf32>
    %82 = vector.broadcast %81 : vector<32x1xf32> to vector<32x32xf32>
    %83 = arith.mulf %78, %82 : vector<32x32xf32>
    %84 = vector.broadcast %8 : vector<1x32xf32> to vector<32x32xf32>
    %85 = arith.mulf %83, %84 : vector<32x32xf32>
    %86 = vector.broadcast %9 : vector<1x32xf32> to vector<32x32xf32>
    %87 = arith.addf %85, %86 : vector<32x32xf32>
    %cst_26 = arith.constant 0.000000e+00 : f32
    %88 = vector.broadcast %cst_26 : f32 to vector<32x32xf32>
    %89 = arith.maximumf %87, %88 : vector<32x32xf32>
    %c0_27 = arith.constant 0 : index
    %c0_28 = arith.constant 0 : index
    %90 = vector.load %arg3[%c0_27, %c0_28] : memref<40x128xf32, #tpu.memory_space<vmem>>, vector<40x128xf32>
    %91 = vector.extract_strided_slice %90 {offsets = [0, 0], sizes = [32, 128], strides = [1, 1]} : vector<40x128xf32> to vector<32x128xf32>
    %92 = vector.extract_strided_slice %90 {offsets = [32, 0], sizes = [8, 128], strides = [1, 1]} : vector<40x128xf32> to vector<8x128xf32>
    %93 = vector.extract_strided_slice %92 {offsets = [0, 0], sizes = [1, 128], strides = [1, 1]} : vector<8x128xf32> to vector<1x128xf32>
    %94 = vector.extract_strided_slice %92 {offsets = [1, 0], sizes = [1, 32], strides = [1, 1]} : vector<8x128xf32> to vector<1x32xf32>
    %95 = vector.extract_strided_slice %92 {offsets = [2, 0], sizes = [1, 32], strides = [1, 1]} : vector<8x128xf32> to vector<1x32xf32>
    %96 = vector.extract_strided_slice %92 {offsets = [3, 0], sizes = [1, 32], strides = [1, 1]} : vector<8x128xf32> to vector<1x32xf32>
    %97 = vector.extract_strided_slice %92 {offsets = [4, 0], sizes = [1, 32], strides = [1, 1]} : vector<8x128xf32> to vector<1x32xf32>
    %cst_29 = arith.constant dense<0.000000e+00> : vector<32x128xf32>
    %98 = tpu.matmul %89, %91, %cst_29 {dimension_numbers = #tpu.dot_dimension_numbers<[1], [0], [0], [1], [0, 0, 1, 1], [], []>} : vector<32x32xf32>, vector<32x128xf32>, vector<32x128xf32> -> vector<32x128xf32>
    %99 = vector.broadcast %93 : vector<1x128xf32> to vector<32x128xf32>
    %100 = arith.addf %98, %99 : vector<32x128xf32>
    %101 = vector.extract_strided_slice %100 {offsets = [0, 0], sizes = [32, 32], strides = [1, 1]} : vector<32x128xf32> to vector<32x32xf32>
    %102 = vector.extract_strided_slice %100 {offsets = [0, 32], sizes = [32, 32], strides = [1, 1]} : vector<32x128xf32> to vector<32x32xf32>
    %103 = vector.extract_strided_slice %100 {offsets = [0, 64], sizes = [32, 32], strides = [1, 1]} : vector<32x128xf32> to vector<32x32xf32>
    %104 = vector.extract_strided_slice %100 {offsets = [0, 96], sizes = [32, 32], strides = [1, 1]} : vector<32x128xf32> to vector<32x32xf32>
    %cst_30 = arith.constant dense<0.000000e+00> : vector<32x32xf32>
    %105 = tpu.matmul %101, %102, %cst_30 {dimension_numbers = #tpu.dot_dimension_numbers<[1], [1], [0], [0], [0, 0, 1, 0], [], []>} : vector<32x32xf32>, vector<32x32xf32>, vector<32x32xf32> -> vector<32x32xf32>
    %cst_31 = arith.constant 0.176776692 : f32
    %106 = vector.broadcast %cst_31 : f32 to vector<32x32xf32>
    %107 = arith.mulf %105, %106 : vector<32x32xf32>
    %cst_32 = arith.constant 0.000000e+00 : f32
    %108 = vector.broadcast %cst_32 : f32 to vector<32x32xf32>
    %109 = arith.cmpf ogt, %1, %108 : vector<32x32xf32>
    %cst_33 = arith.constant -1.000000e+30 : f32
    %110 = vector.broadcast %cst_33 : f32 to vector<32x32xf32>
    %111 = arith.select %109, %107, %110 : vector<32x32xi1>, vector<32x32xf32>
    %cst_34 = arith.constant dense<0xFF800000> : vector<32xf32>
    %112 = vector.multi_reduction <maximumf>, %111, %cst_34 [1] : vector<32x32xf32> to vector<32xf32>
    %113 = vector.shape_cast %112 : vector<32xf32> to vector<32x1xf32>
    %cst_35 = arith.constant -1.000000e+30 : f32
    %cst_36 = arith.constant 5.000000e-01 : f32
    %114 = arith.mulf %cst_35, %cst_36 : f32
    %115 = vector.broadcast %114 : f32 to vector<32x1xf32>
    %116 = arith.cmpf ole, %113, %115 : vector<32x1xf32>
    %cst_37 = arith.constant 0.000000e+00 : f32
    %117 = vector.broadcast %cst_37 : f32 to vector<32x1xf32>
    %118 = arith.select %116, %117, %113 : vector<32x1xi1>, vector<32x1xf32>
    %119 = vector.broadcast %118 : vector<32x1xf32> to vector<32x32xf32>
    %120 = arith.subf %107, %119 : vector<32x32xf32>
    %cst_38 = arith.constant 6.000000e+01 : f32
    %121 = vector.broadcast %cst_38 : f32 to vector<32x32xf32>
    %122 = arith.minimumf %120, %121 : vector<32x32xf32>
    %123 = math.exp %122 : vector<32x32xf32>
    %124 = arith.mulf %123, %1 : vector<32x32xf32>
    %cst_39 = arith.constant dense<0.000000e+00> : vector<32xf32>
    %125 = vector.multi_reduction <add>, %124, %cst_39 [1] : vector<32x32xf32> to vector<32xf32>
    %126 = vector.shape_cast %125 : vector<32xf32> to vector<32x1xf32>
    %cst_40 = arith.constant 0.000000e+00 : f32
    %127 = vector.broadcast %cst_40 : f32 to vector<32x1xf32>
    %128 = arith.cmpf oeq, %126, %127 : vector<32x1xf32>
    %cst_41 = arith.constant 1.000000e+00 : f32
    %129 = vector.broadcast %cst_41 : f32 to vector<32x1xf32>
    %130 = arith.select %128, %129, %126 : vector<32x1xi1>, vector<32x1xf32>
    %131 = tpu.reciprocal %130 {approx = true} : vector<32x1xf32> -> vector<32x1xf32>
    %132 = vector.broadcast %131 : vector<32x1xf32> to vector<32x32xf32>
    %133 = arith.mulf %124, %132 : vector<32x32xf32>
    %cst_42 = arith.constant dense<0.000000e+00> : vector<32x32xf32>
    %134 = tpu.matmul %133, %103, %cst_42 {dimension_numbers = #tpu.dot_dimension_numbers<[1], [0], [0], [1], [0, 0, 1, 1], [], []>} : vector<32x32xf32>, vector<32x32xf32>, vector<32x32xf32> -> vector<32x32xf32>
    %135 = vector.broadcast %94 : vector<1x32xf32> to vector<32x32xf32>
    %136 = arith.mulf %134, %135 : vector<32x32xf32>
    %137 = vector.broadcast %95 : vector<1x32xf32> to vector<32x32xf32>
    %138 = arith.mulf %104, %137 : vector<32x32xf32>
    %139 = arith.addf %136, %138 : vector<32x32xf32>
    %cst_43 = arith.constant dense<0.000000e+00> : vector<32xf32>
    %140 = vector.multi_reduction <add>, %139, %cst_43 [1] : vector<32x32xf32> to vector<32xf32>
    %141 = vector.shape_cast %140 : vector<32xf32> to vector<32x1xf32>
    %142 = arith.negf %141 : vector<32x1xf32>
    %143 = math.exp %142 : vector<32x1xf32>
    %cst_44 = arith.constant 1.000000e+00 : f32
    %144 = vector.broadcast %cst_44 : f32 to vector<32x1xf32>
    %145 = arith.addf %144, %143 : vector<32x1xf32>
    %146 = arith.divf %144, %145 : vector<32x1xf32>
    %147 = vector.broadcast %146 : vector<32x1xf32> to vector<32x32xf32>
    %148 = arith.mulf %147, %104 : vector<32x32xf32>
    %cst_45 = arith.constant 1.000000e+00 : f32
    %149 = vector.broadcast %cst_45 : f32 to vector<32x1xf32>
    %150 = arith.subf %149, %146 : vector<32x1xf32>
    %151 = vector.broadcast %150 : vector<32x1xf32> to vector<32x32xf32>
    %152 = arith.mulf %151, %134 : vector<32x32xf32>
    %153 = arith.addf %148, %152 : vector<32x32xf32>
    %cst_46 = arith.constant dense<0.000000e+00> : vector<32xf32>
    %154 = vector.multi_reduction <add>, %153, %cst_46 [1] : vector<32x32xf32> to vector<32xf32>
    %155 = vector.shape_cast %154 : vector<32xf32> to vector<32x1xf32>
    %cst_47 = arith.constant 3.200000e+01 : f32
    %156 = vector.broadcast %cst_47 : f32 to vector<32x1xf32>
    %157 = arith.divf %155, %156 : vector<32x1xf32>
    %158 = vector.broadcast %157 : vector<32x1xf32> to vector<32x32xf32>
    %159 = arith.subf %153, %158 : vector<32x32xf32>
    %160 = arith.mulf %159, %159 : vector<32x32xf32>
    %cst_48 = arith.constant dense<0.000000e+00> : vector<32xf32>
    %161 = vector.multi_reduction <add>, %160, %cst_48 [1] : vector<32x32xf32> to vector<32xf32>
    %162 = vector.shape_cast %161 : vector<32xf32> to vector<32x1xf32>
    %cst_49 = arith.constant 3.200000e+01 : f32
    %163 = vector.broadcast %cst_49 : f32 to vector<32x1xf32>
    %164 = arith.divf %162, %163 : vector<32x1xf32>
    %165 = vector.broadcast %157 : vector<32x1xf32> to vector<32x32xf32>
    %166 = arith.subf %153, %165 : vector<32x32xf32>
    %cst_50 = arith.constant 9.99999974E-6 : f32
    %167 = vector.broadcast %cst_50 : f32 to vector<32x1xf32>
    %168 = arith.addf %164, %167 : vector<32x1xf32>
    %169 = math.rsqrt %168 : vector<32x1xf32>
    %170 = vector.broadcast %169 : vector<32x1xf32> to vector<32x32xf32>
    %171 = arith.mulf %166, %170 : vector<32x32xf32>
    %172 = vector.broadcast %96 : vector<1x32xf32> to vector<32x32xf32>
    %173 = arith.mulf %171, %172 : vector<32x32xf32>
    %174 = vector.broadcast %97 : vector<1x32xf32> to vector<32x32xf32>
    %175 = arith.addf %173, %174 : vector<32x32xf32>
    %cst_51 = arith.constant 0.000000e+00 : f32
    %176 = vector.broadcast %cst_51 : f32 to vector<32x32xf32>
    %177 = arith.maximumf %175, %176 : vector<32x32xf32>
    %178 = arith.addf %177, %89 : vector<32x32xf32>
    %c0_52 = arith.constant 0 : index
    %c0_53 = arith.constant 0 : index
    %179 = vector.load %arg4[%c0_52, %c0_53] : memref<40x64xf32, #tpu.memory_space<vmem>>, vector<40x64xf32>
    %180 = vector.extract_strided_slice %179 {offsets = [0, 0], sizes = [32, 64], strides = [1, 1]} : vector<40x64xf32> to vector<32x64xf32>
    %cst_54 = arith.constant dense<0.000000e+00> : vector<32x64xf32>
    %181 = tpu.matmul %178, %180, %cst_54 {dimension_numbers = #tpu.dot_dimension_numbers<[1], [0], [0], [1], [0, 0, 1, 1], [], []>} : vector<32x32xf32>, vector<32x64xf32>, vector<32x64xf32> -> vector<32x64xf32>
    %182 = vector.extract_strided_slice %179 {offsets = [32, 0], sizes = [1, 64], strides = [1, 1]} : vector<40x64xf32> to vector<1x64xf32>
    %183 = vector.broadcast %182 : vector<1x64xf32> to vector<32x64xf32>
    %184 = arith.addf %181, %183 : vector<32x64xf32>
    %cst_55 = arith.constant 0.000000e+00 : f32
    %185 = vector.broadcast %cst_55 : f32 to vector<32x64xf32>
    %186 = arith.maximumf %184, %185 : vector<32x64xf32>
    %c0_56 = arith.constant 0 : index
    %c0_57 = arith.constant 0 : index
    %187 = vector.load %arg5[%c0_56, %c0_57] : memref<72x64xf32, #tpu.memory_space<vmem>>, vector<72x64xf32>
    %188 = vector.extract_strided_slice %187 {offsets = [0, 0], sizes = [64, 64], strides = [1, 1]} : vector<72x64xf32> to vector<64x64xf32>
    %cst_58 = arith.constant dense<0.000000e+00> : vector<32x64xf32>
    %189 = tpu.matmul %186, %188, %cst_58 {dimension_numbers = #tpu.dot_dimension_numbers<[1], [0], [0], [1], [0, 0, 1, 1], [], []>} : vector<32x64xf32>, vector<64x64xf32>, vector<32x64xf32> -> vector<32x64xf32>
    %190 = vector.extract_strided_slice %187 {offsets = [64, 0], sizes = [1, 64], strides = [1, 1]} : vector<72x64xf32> to vector<1x64xf32>
    %191 = vector.broadcast %190 : vector<1x64xf32> to vector<32x64xf32>
    %192 = arith.addf %189, %191 : vector<32x64xf32>
    %cst_59 = arith.constant 0.000000e+00 : f32
    %193 = vector.broadcast %cst_59 : f32 to vector<32x64xf32>
    %194 = arith.maximumf %192, %193 : vector<32x64xf32>
    %c0_60 = arith.constant 0 : index
    %c0_61 = arith.constant 0 : index
    %195 = vector.load %arg6[%c0_60, %c0_61] : memref<72x8xf32, #tpu.memory_space<vmem>>, vector<72x8xf32>
    %196 = vector.extract_strided_slice %195 {offsets = [0, 0], sizes = [64, 8], strides = [1, 1]} : vector<72x8xf32> to vector<64x8xf32>
    %cst_62 = arith.constant dense<0.000000e+00> : vector<32x8xf32>
    %197 = tpu.matmul %194, %196, %cst_62 {dimension_numbers = #tpu.dot_dimension_numbers<[1], [0], [0], [1], [0, 0, 1, 1], [], []>} : vector<32x64xf32>, vector<64x8xf32>, vector<32x8xf32> -> vector<32x8xf32>
    %198 = vector.extract_strided_slice %195 {offsets = [64, 0], sizes = [1, 8], strides = [1, 1]} : vector<72x8xf32> to vector<1x8xf32>
    %199 = vector.broadcast %198 : vector<1x8xf32> to vector<32x8xf32>
    %200 = arith.addf %197, %199 : vector<32x8xf32>
    %c0_63 = arith.constant 0 : index
    %c0_64 = arith.constant 0 : index
    %201 = vector.load %arg7[%c0_63, %c0_64] : memref<32x8xf32, #tpu.memory_space<vmem>>, vector<32x8xf32>
    tpu.vector_store %arg7[%c0_63, %c0_64], %200 {strides = array<i32>} : memref<32x8xf32, #tpu.memory_space<vmem>>, vector<32x8xf32>,
    return
  }
}

</mosaic_0001>

<llo_original>
// kernel: tpu_custom_call.1
$region0: #{tpu_custom_call.1}
  #allocation0 [shape = 'u32[]', space=smem, size = 0x4, offset = 0x4, fixed_abs, tag = 'smem constant byte address 0x4 - core index']
  #allocation1 [shape = 'u32[72,128]{1,0:T(1,128)}', space=vmem, size = 0x9000, scoped, tag = 'internal scratch']
  %s0 = inlined_call_operand.vmem [shape: f32[32,16], index: 0, kind: input, shape index: {}]
  %s1 = inlined_call_operand.vmem [shape: f32[32,32], index: 1, kind: input, shape index: {}]
  %s2 = inlined_call_operand.vmem [shape: f32[24,128], index: 2, kind: input, shape index: {}]
  %s3 = inlined_call_operand.vmem [shape: f32[40,128], index: 3, kind: input, shape index: {}]
  %s4 = inlined_call_operand.vmem [shape: f32[40,64], index: 4, kind: input, shape index: {}]
  %s5 = inlined_call_operand.vmem [shape: f32[72,64], index: 5, kind: input, shape index: {}]
  %s6 = inlined_call_operand.vmem [shape: f32[72,8], index: 6, kind: input, shape index: {}]
  %s7 = inlined_call_operand.vmem [shape: f32[32,8], index: 7, kind: output, shape index: {}]
  %s8 = sld [smem:[#allocation0]]
  $region38: #{tpu_custom_call.1} parent=0
    _
  %s10 = ssub.s32 1, %s8
  %s11 = scalar_select 0, %s10, %s8
  // Predicated region
  $region2: #{tpu_custom_call.1} parent=0 // pred_check
    _
  $region3: #{tpu_custom_call.1} parent=0 // pred_check_branch
    %13 = sbr.rel (0) target = $region5
  $region4: #{tpu_custom_call.1} parent=0 // pred_region
    _
  $region5: #{tpu_custom_call.1} parent=0 // pred_fallthru
    _
  // Predicated region
  $region6: #{tpu_custom_call.1} parent=0 // pred_check
    _
  $region7: #{tpu_custom_call.1} parent=0 // pred_check_branch
    %15 = sbr.rel (0) target = $region9
  $region8: #{tpu_custom_call.1} parent=0 // pred_region
    _
  $region9: #{tpu_custom_call.1} parent=0 // pred_fallthru
    _
  // Predicated region
  $region10: #{tpu_custom_call.1} parent=0 // pred_check
    _
  $region11: #{tpu_custom_call.1} parent=0 // pred_check_branch
    %17 = sbr.rel (0) target = $region13
  $region12: #{tpu_custom_call.1} parent=0 // pred_region
    _
  $region13: #{tpu_custom_call.1} parent=0 // pred_fallthru
    _
  // Predicated region
  $region14: #{tpu_custom_call.1} parent=0 // pred_check
    _
  $region15: #{tpu_custom_call.1} parent=0 // pred_check_branch
    %19 = sbr.rel (0) target = $region17
  $region16: #{tpu_custom_call.1} parent=0 // pred_region
    _
  $region17: #{tpu_custom_call.1} parent=0 // pred_fallthru
    _
  // Predicated region
  $region18: #{tpu_custom_call.1} parent=0 // pred_check
    _
  $region19: #{tpu_custom_call.1} parent=0 // pred_check_branch
    %21 = sbr.rel (0) target = $region21
  $region20: #{tpu_custom_call.1} parent=0 // pred_region
    _
  $region21: #{tpu_custom_call.1} parent=0 // pred_fallthru
    _
  // Predicated region
  $region22: #{tpu_custom_call.1} parent=0 // pred_check
    _
  $region23: #{tpu_custom_call.1} parent=0 // pred_check_branch
    %23 = sbr.rel (0) target = $region25
  $region24: #{tpu_custom_call.1} parent=0 // pred_region
    _
  $region25: #{tpu_custom_call.1} parent=0 // pred_fallthru
    _
  // Predicated region
  $region26: #{tpu_custom_call.1} parent=0 // pred_check
    _
  $region27: #{tpu_custom_call.1} parent=0 // pred_check_branch
    %25 = sbr.rel (0) target = $region29
  $region28: #{tpu_custom_call.1} parent=0 // pred_region
    _
  $region29: #{tpu_custom_call.1} parent=0 // pred_fallthru
    _
  %v26 = vld [vmem:[%s0] sm:$0xff]
  %v27 = vld [vmem:[%s0 + $0x8] sm:$0xff]
  %v28 = vld [vmem:[%s0 + $0x10] sm:$0xff]
  %v29 = vld [vmem:[%s0 + $0x18] sm:$0xff]
  %v30 = vld [vmem:[%s1] sm:$0xff]
  %v31 = vld [vmem:[%s1 + $0x8] sm:$0xff]
  %v32 = vld [vmem:[%s1 + $0x10] sm:$0xff]
  %v33 = vld [vmem:[%s1 + $0x18] sm:$0xff]
  %v34 = vld [vmem:[%s2] sm:$0xff]
  %v35 = vld [vmem:[%s2 + $0x8] sm:$0xff]
  %v36 = vld [vmem:[%s2 + $0x10] sm:$0xff]
  %v37 = vperm.slane %v36, 0
  %vm38 = vcmask 130048
  %v40 = vsel %vm38, %v26, 0
  %v43 = vsel %vm38, %v27, 0
  %v46 = vsel %vm38, %v28, 0
  %v49 = vsel %vm38, %v29, 0
  %51 = vmatpush.msra.mxu0 0.0
  %52 = vmatpush.msra.mxu0 0.0
  %53 = vmatpush.msra.mxu0 0.0
  %54 = vmatpush.msra.mxu0 0.0
  %55 = vmatpush.msra.mxu0 0.0
  %56 = vmatpush.msra.mxu0 0.0
  %57 = vmatpush.msra.mxu0 0.0
  %58 = vmatpush.msra.mxu0 0.0
  %59 = vmatpush.msra.mxu0 0.0
  %60 = vmatpush.msra.mxu0 0.0
  %61 = vmatpush.msra.mxu0 0.0
  %62 = vmatpush.msra.mxu0 0.0
  %63 = vmatpush.msra.mxu0 0.0
  %64 = vmatpush.msra.mxu0 0.0
  %65 = vmatpush.msra.mxu0 %v35
  %66 = vmatpush.msra.mxu0 %v34
  %67 = vmatmul.f32.gmra.mxu0 %v40
  %v68 = vpop.f32.mrf.mxu0
  %v69 = vadd.f32 %v37, %v68
  %70 = vmatmul.f32.gmra.mxu0 %v43
  %v71 = vpop.f32.mrf.mxu0
  %v72 = vadd.f32 %v37, %v71
  %73 = vmatmul.f32.gmra.mxu0 %v46
  %v74 = vpop.f32.mrf.mxu0
  %v75 = vadd.f32 %v37, %v74
  %76 = vmatmul.f32.gmra.mxu0 %v49
  %v77 = vpop.f32.mrf.mxu0
  %v78 = vadd.f32 %v37, %v77
  %79 = vdwg.mxu0
  %84 = vrot.lane.b32.xlu0 %v69, 96
  %v85 = vpop.permute.xlu0 %84
  %86 = vrot.lane.b32.xlu0 %v72, 96
  %v87 = vpop.permute.xlu0 %86
  %88 = vrot.lane.b32.xlu0 %v75, 96
  %v89 = vpop.permute.xlu0 %88
  %90 = vrot.lane.b32.xlu0 %v78, 96
  %v91 = vpop.permute.xlu0 %90
  %vm92 = vcmask 261120
  %v93 = vsel %vm92, %v69, 0
  %v95 = vsel %vm92, %v72, 0
  %v97 = vsel %vm92, %v75, 0
  %v99 = vsel %vm92, %v78, 0
  %v101 = vsel %vm92, %v85, 0
  %v103 = vsel %vm92, %v87, 0
  %v105 = vsel %vm92, %v89, 0
  %v107 = vsel %vm92, %v91, 0
  %109 = vmatpush.xpose.msra.mxu0 0.0
  %110 = vmatpush.xpose.msra.mxu0 0.0
  %111 = vmatpush.xpose.msra.mxu0 0.0
  %112 = vmatpush.xpose.msra.mxu0 0.0
  %113 = vmatpush.xpose.msra.mxu0 0.0
  %114 = vmatpush.xpose.msra.mxu0 0.0
  %115 = vmatpush.xpose.msra.mxu0 0.0
  %116 = vmatpush.xpose.msra.mxu0 0.0
  %117 = vmatpush.xpose.msra.mxu0 0.0
  %118 = vmatpush.xpose.msra.mxu0 0.0
  %119 = vmatpush.xpose.msra.mxu0 0.0
  %120 = vmatpush.xpose.msra.mxu0 0.0
  %121 = vmatpush.xpose.msra.mxu0 %v107
  %122 = vmatpush.xpose.msra.mxu0 %v105
  %123 = vmatpush.xpose.msra.mxu0 %v103
  %124 = vmatpush.xpose.msra.mxu0 %v101
  %125 = vmatmul.f32.gmra.mxu0 %v93
  %v126 = vpop.f32.mrf.mxu0
  %v127 = vadd.f32 0.0, %v126
  %128 = vmatmul.f32.gmra.mxu0 %v95
  %v129 = vpop.f32.mrf.mxu0
  %v130 = vadd.f32 0.0, %v129
  %131 = vmatmul.f32.gmra.mxu0 %v97
  %v132 = vpop.f32.mrf.mxu0
  %v133 = vadd.f32 0.0, %v132
  %134 = vmatmul.f32.gmra.mxu0 %v99
  %v135 = vpop.f32.mrf.mxu0
  %v136 = vadd.f32 0.0, %v135
  %137 = vdwg.mxu0
  %v138 = vmul.f32 %v127, 0.17677669
  %v139 = vmul.f32 %v130, 0.17677669
  %v140 = vmul.f32 %v133, 0.17677669
  %v141 = vmul.f32 %v136, 0.17677669
  %vm142 = vcmp.gt.f32.partialorder %v30, 0.0
  %vm143 = vcmp.gt.f32.partialorder %v31, 0.0
  %vm144 = vcmp.gt.f32.partialorder %v32, 0.0
  %vm145 = vcmp.gt.f32.partialorder %v33, 0.0
  %v146 = vsel %vm142, %v138, -1e+30
  %v147 = vsel %vm143, %v139, -1e+30
  %v148 = vsel %vm144, %v140, -1e+30
  %v149 = vsel %vm145, %v141, -1e+30
  %v150 = vsel %vm92, %v146, -inf
  %151 = vmax.xlane.f32.xlu0 %v150
  %v152 = vpop.xlane.xlu0 %151
  %v153 = vsel %vm92, %v147, -inf
  %154 = vmax.xlane.f32.xlu0 %v153
  %v155 = vpop.xlane.xlu0 %154
  %v156 = vsel %vm92, %v148, -inf
  %157 = vmax.xlane.f32.xlu0 %v156
  %v158 = vpop.xlane.xlu0 %157
  %v159 = vsel %vm92, %v149, -inf
  %160 = vmax.xlane.f32.xlu0 %v159
  %v161 = vpop.xlane.xlu0 %160
  %vm162 = vcmp.le.f32.partialorder %v152, -5e+29
  %vm163 = vcmp.le.f32.partialorder %v155, -5e+29
  %vm164 = vcmp.le.f32.partialorder %v158, -5e+29
  %vm165 = vcmp.le.f32.partialorder %v161, -5e+29
  %v166 = vsel %vm162, 0.0, %v152
  %v167 = vsel %vm163, 0.0, %v155
  %v168 = vsel %vm164, 0.0, %v158
  %v169 = vsel %vm165, 0.0, %v161
  %v170 = vsub.f32 %v138, %v166
  %v171 = vsub.f32 %v139, %v167
  %v172 = vsub.f32 %v140, %v168
  %v173 = vsub.f32 %v141, %v169
  %v174 = vmin.f32 %v170, 60.0
  %v175 = vmin.f32 %v171, 60.0
  %v176 = vmin.f32 %v172, 60.0
  %v177 = vmin.f32 %v173, 60.0
  %v178 = vmul.f32 %v174, 1.442695
  %v179 = vpow.pop %v178
  %v180 = vmul.f32 %v175, 1.442695
  %v181 = vpow.pop %v180
  %v182 = vmul.f32 %v176, 1.442695
  %v183 = vpow.pop %v182
  %v184 = vmul.f32 %v177, 1.442695
  %v185 = vpow.pop %v184
  %v186 = vmul.f32 %v179, %v30
  %v187 = vmul.f32 %v181, %v31
  %v188 = vmul.f32 %v183, %v32
  %v189 = vmul.f32 %v185, %v33
  %v190 = vsel %vm92, %v186, 0.0
  %191 = vadd.xlane.f32.xlu0 %v190
  %v192 = vpop.xlane.xlu0 %191
  %v193 = vsel %vm92, %v187, 0.0
  %194 = vadd.xlane.f32.xlu0 %v193
  %v195 = vpop.xlane.xlu0 %194
  %v196 = vsel %vm92, %v188, 0.0
  %197 = vadd.xlane.f32.xlu0 %v196
  %v198 = vpop.xlane.xlu0 %197
  %v199 = vsel %vm92, %v189, 0.0
  %200 = vadd.xlane.f32.xlu0 %v199
  %v201 = vpop.xlane.xlu0 %200
  %vm202 = vcmp.eq.f32.partialorder %v192, 0.0
  %vm203 = vcmp.eq.f32.partialorder %v195, 0.0
  %vm204 = vcmp.eq.f32.partialorder %v198, 0.0
  %vm205 = vcmp.eq.f32.partialorder %v201, 0.0
  %v206 = vsel %vm202, 1.0, %v192
  %v207 = vsel %vm203, 1.0, %v195
  %v208 = vsel %vm204, 1.0, %v198
  %v209 = vsel %vm205, 1.0, %v201
  %v210 = vrcp.pop %v206
  %v211 = vrcp.pop %v207
  %v212 = vrcp.pop %v208
  %v213 = vrcp.pop %v209
  %v214 = vmul.f32 %v186, %v210
  %v215 = vmul.f32 %v187, %v211
  %v216 = vmul.f32 %v188, %v212
  %v217 = vmul.f32 %v189, %v213
  %218 = vrot.lane.b32.xlu0 %v69, 64
  %v219 = vpop.permute.xlu0 %218
  %220 = vrot.lane.b32.xlu0 %v72, 64
  %v221 = vpop.permute.xlu0 %220
  %222 = vrot.lane.b32.xlu0 %v75, 64
  %v223 = vpop.permute.xlu0 %222
  %224 = vrot.lane.b32.xlu0 %v78, 64
  %v225 = vpop.permute.xlu0 %224
  %v231 = vsel %vm92, %v214, 0
  %v234 = vsel %vm92, %v215, 0
  %v237 = vsel %vm92, %v216, 0
  %v240 = vsel %vm92, %v217, 0
  %242 = vmatpush.msra.mxu0 0.0
  %243 = vmatpush.msra.mxu0 0.0
  %244 = vmatpush.msra.mxu0 0.0
  %245 = vmatpush.msra.mxu0 0.0
  %246 = vmatpush.msra.mxu0 0.0
  %247 = vmatpush.msra.mxu0 0.0
  %248 = vmatpush.msra.mxu0 0.0
  %249 = vmatpush.msra.mxu0 0.0
  %250 = vmatpush.msra.mxu0 0.0
  %251 = vmatpush.msra.mxu0 0.0
  %252 = vmatpush.msra.mxu0 0.0
  %253 = vmatpush.msra.mxu0 0.0
  %254 = vmatpush.msra.mxu0 %v225
  %255 = vmatpush.msra.mxu0 %v223
  %256 = vmatpush.msra.mxu0 %v221
  %257 = vmatpush.msra.mxu0 %v219
  %258 = vmatmul.f32.gmra.mxu0 %v231
  %v259 = vpop.f32.mrf.mxu0
  %v260 = vadd.f32 0.0, %v259
  %261 = vmatmul.f32.gmra.mxu0 %v234
  %v262 = vpop.f32.mrf.mxu0
  %v263 = vadd.f32 0.0, %v262
  %264 = vmatmul.f32.gmra.mxu0 %v237
  %v265 = vpop.f32.mrf.mxu0
  %v266 = vadd.f32 0.0, %v265
  %267 = vmatmul.f32.gmra.mxu0 %v240
  %v268 = vpop.f32.mrf.mxu0
  %v269 = vadd.f32 0.0, %v268
  %270 = vdwg.mxu0
  %v271 = vperm.slane %v36, 1
  %v272 = vmul.f32 %v260, %v271
  %v273 = vmul.f32 %v263, %v271
  %v274 = vmul.f32 %v266, %v271
  %v275 = vmul.f32 %v269, %v271
  %v276 = vperm.slane %v36, 2
  %278 = vrot.lane.b32.xlu0 %v276, 96
  %v279 = vpop.permute.xlu0 %278
  %v281 = vmul.f32 %v69, %v279
  %v282 = vmul.f32 %v72, %v279
  %v283 = vmul.f32 %v75, %v279
  %v284 = vmul.f32 %v78, %v279
  %289 = vrot.lane.b32.xlu0 %v281, 32
  %v290 = vpop.permute.xlu0 %289
  %291 = vrot.lane.b32.xlu0 %v282, 32
  %v292 = vpop.permute.xlu0 %291
  %293 = vrot.lane.b32.xlu0 %v283, 32
  %v294 = vpop.permute.xlu0 %293
  %295 = vrot.lane.b32.xlu0 %v284, 32
  %v296 = vpop.permute.xlu0 %295
  %v301 = vadd.f32 %v272, %v290
  %v302 = vadd.f32 %v273, %v292
  %v303 = vadd.f32 %v274, %v294
  %v304 = vadd.f32 %v275, %v296
  %v305 = vsel %vm92, %v301, 0.0
  %306 = vadd.xlane.f32.xlu0 %v305
  %v307 = vpop.xlane.xlu0 %306
  %v308 = vsel %vm92, %v302, 0.0
  %309 = vadd.xlane.f32.xlu0 %v308
  %v310 = vpop.xlane.xlu0 %309
  %v311 = vsel %vm92, %v303, 0.0
  %312 = vadd.xlane.f32.xlu0 %v311
  %v313 = vpop.xlane.xlu0 %312
  %v314 = vsel %vm92, %v304, 0.0
  %315 = vadd.xlane.f32.xlu0 %v314
  %v316 = vpop.xlane.xlu0 %315
  %v317 = vxor.u32 %v307, 2147483648
  %v318 = vxor.u32 %v310, 2147483648
  %v319 = vxor.u32 %v313, 2147483648
  %v320 = vxor.u32 %v316, 2147483648
  %v321 = vmul.f32 %v317, 1.442695
  %v322 = vpow.pop %v321
  %v323 = vmul.f32 %v318, 1.442695
  %v324 = vpow.pop %v323
  %v325 = vmul.f32 %v319, 1.442695
  %v326 = vpow.pop %v325
  %v327 = vmul.f32 %v320, 1.442695
  %v328 = vpow.pop %v327
  %v329 = vadd.f32 %v322, 1.0
  %v330 = vadd.f32 %v324, 1.0
  %v331 = vadd.f32 %v326, 1.0
  %v332 = vadd.f32 %v328, 1.0
  %v333 = vrcp.pop %v329
  %v334 = vmul.f32 %v329, %v333
  %v335 = vsub.f32 1.0, %v334
  %v336 = vmul.f32 %v333, %v335
  %v337 = vadd.f32 %v333, %v336
  %vm338 = vweird.f32 %v329
  %vm339 = vweird.f32 %v333
  %vm340 = vmor %vm338, %vm339
  %v341 = vsel %vm340, %v333, %v337
  %v342 = vand.u32 2147483647, %v329
  %vm343 = vcmp.eq.f32.partialorder %v342, 8.507059e+37
  %v344 = vand.u32 %v329, 2147483648
  %v345 = vor.u32 1.1754944e-38, %v344
  %v346 = vsel %vm343, %v345, %v341
  %v347 = vmul.f32 1.0, %v346
  %v348 = vrcp.pop %v330
  %v349 = vmul.f32 %v330, %v348
  %v350 = vsub.f32 1.0, %v349
  %v351 = vmul.f32 %v348, %v350
  %v352 = vadd.f32 %v348, %v351
  %vm353 = vweird.f32 %v330
  %vm354 = vweird.f32 %v348
  %vm355 = vmor %vm353, %vm354
  %v356 = vsel %vm355, %v348, %v352
  %v357 = vand.u32 2147483647, %v330
  %vm358 = vcmp.eq.f32.partialorder %v357, 8.507059e+37
  %v359 = vand.u32 %v330, 2147483648
  %v360 = vor.u32 1.1754944e-38, %v359
  %v361 = vsel %vm358, %v360, %v356
  %v362 = vmul.f32 1.0, %v361
  %v363 = vrcp.pop %v331
  %v364 = vmul.f32 %v331, %v363
  %v365 = vsub.f32 1.0, %v364
  %v366 = vmul.f32 %v363, %v365
  %v367 = vadd.f32 %v363, %v366
  %vm368 = vweird.f32 %v331
  %vm369 = vweird.f32 %v363
  %vm370 = vmor %vm368, %vm369
  %v371 = vsel %vm370, %v363, %v367
  %v372 = vand.u32 2147483647, %v331
  %vm373 = vcmp.eq.f32.partialorder %v372, 8.507059e+37
  %v374 = vand.u32 %v331, 2147483648
  %v375 = vor.u32 1.1754944e-38, %v374
  %v376 = vsel %vm373, %v375, %v371
  %v377 = vmul.f32 1.0, %v376
  %v378 = vrcp.pop %v332
  %v379 = vmul.f32 %v332, %v378
  %v380 = vsub.f32 1.0, %v379
  %v381 = vmul.f32 %v378, %v380
  %v382 = vadd.f32 %v378, %v381
  %vm383 = vweird.f32 %v332
  %vm384 = vweird.f32 %v378
  %vm385 = vmor %vm383, %vm384
  %v386 = vsel %vm385, %v378, %v382
  %v387 = vand.u32 2147483647, %v332
  %vm388 = vcmp.eq.f32.partialorder %v387, 8.507059e+37
  %v389 = vand.u32 %v332, 2147483648
  %v390 = vor.u32 1.1754944e-38, %v389
  %v391 = vsel %vm388, %v390, %v386
  %v392 = vmul.f32 1.0, %v391
  %v393 = vmul.f32 %v347, %v69
  %v394 = vmul.f32 %v362, %v72
  %v395 = vmul.f32 %v377, %v75
  %v396 = vmul.f32 %v392, %v78
  %v397 = vsub.f32 1.0, %v347
  %v398 = vsub.f32 1.0, %v362
  %v399 = vsub.f32 1.0, %v377
  %v400 = vsub.f32 1.0, %v392
  %v401 = vmul.f32 %v397, %v260
  %v402 = vmul.f32 %v398, %v263
  %v403 = vmul.f32 %v399, %v266
  %v404 = vmul.f32 %v400, %v269
  %409 = vrot.lane.b32.xlu0 %v401, 96
  %v410 = vpop.permute.xlu0 %409
  %411 = vrot.lane.b32.xlu0 %v402, 96
  %v412 = vpop.permute.xlu0 %411
  %413 = vrot.lane.b32.xlu0 %v403, 96
  %v414 = vpop.permute.xlu0 %413
  %415 = vrot.lane.b32.xlu0 %v404, 96
  %v416 = vpop.permute.xlu0 %415
  %v421 = vadd.f32 %v393, %v410
  %v422 = vadd.f32 %v394, %v412
  %v423 = vadd.f32 %v395, %v414
  %v424 = vadd.f32 %v396, %v416
  %429 = vrot.lane.b32.xlu0 %v421, 32
  %v430 = vpop.permute.xlu0 %429
  %431 = vrot.lane.b32.xlu0 %v422, 32
  %v432 = vpop.permute.xlu0 %431
  %433 = vrot.lane.b32.xlu0 %v423, 32
  %v434 = vpop.permute.xlu0 %433
  %435 = vrot.lane.b32.xlu0 %v424, 32
  %v436 = vpop.permute.xlu0 %435
  %v441 = vsel %vm92, %v430, 0.0
  %442 = vadd.xlane.f32.xlu0 %v441
  %v443 = vpop.xlane.xlu0 %442
  %v444 = vsel %vm92, %v432, 0.0
  %445 = vadd.xlane.f32.xlu0 %v444
  %v446 = vpop.xlane.xlu0 %445
  %v447 = vsel %vm92, %v434, 0.0
  %448 = vadd.xlane.f32.xlu0 %v447
  %v449 = vpop.xlane.xlu0 %448
  %v450 = vsel %vm92, %v436, 0.0
  %451 = vadd.xlane.f32.xlu0 %v450
  %v452 = vpop.xlane.xlu0 %451
  %v453 = vrcp.pop 32.0
  %v454 = vmul.f32 32.0, %v453
  %v455 = vsub.f32 1.0, %v454
  %v456 = vmul.f32 %v453, %v455
  %v457 = vadd.f32 %v453, %v456
  %vm458 = vweird.f32 %v453
  %v459 = vsel %vm458, %v453, %v457
  %v460 = vmul.f32 %v443, %v459
  %v461 = vmul.f32 %v446, %v459
  %v462 = vmul.f32 %v449, %v459
  %v463 = vmul.f32 %v452, %v459
  %v464 = vsub.f32 %v421, %v460
  %v465 = vsub.f32 %v422, %v461
  %v466 = vsub.f32 %v423, %v462
  %v467 = vsub.f32 %v424, %v463
  %v468 = vmul.f32 %v464, %v464
  %v469 = vmul.f32 %v465, %v465
  %v470 = vmul.f32 %v466, %v466
  %v471 = vmul.f32 %v467, %v467
  %476 = vrot.lane.b32.xlu0 %v468, 32
  %v477 = vpop.permute.xlu0 %476
  %478 = vrot.lane.b32.xlu0 %v469, 32
  %v479 = vpop.permute.xlu0 %478
  %480 = vrot.lane.b32.xlu0 %v470, 32
  %v481 = vpop.permute.xlu0 %480
  %482 = vrot.lane.b32.xlu0 %v471, 32
  %v483 = vpop.permute.xlu0 %482
  %v488 = vsel %vm92, %v477, 0.0
  %489 = vadd.xlane.f32.xlu0 %v488
  %v490 = vpop.xlane.xlu0 %489
  %v491 = vsel %vm92, %v479, 0.0
  %492 = vadd.xlane.f32.xlu0 %v491
  %v493 = vpop.xlane.xlu0 %492
  %v494 = vsel %vm92, %v481, 0.0
  %495 = vadd.xlane.f32.xlu0 %v494
  %v496 = vpop.xlane.xlu0 %495
  %v497 = vsel %vm92, %v483, 0.0
  %498 = vadd.xlane.f32.xlu0 %v497
  %v499 = vpop.xlane.xlu0 %498
  %v500 = vmul.f32 %v490, %v459
  %v501 = vmul.f32 %v493, %v459
  %v502 = vmul.f32 %v496, %v459
  %v503 = vmul.f32 %v499, %v459
  %v504 = vadd.f32 %v500, 1e-05
  %v505 = vadd.f32 %v501, 1e-05
  %v506 = vadd.f32 %v502, 1e-05
  %v507 = vadd.f32 %v503, 1e-05
  %v508 = vrsqrt.pop %v504
  %v509 = vmul.f32 %v508, %v504
  %v510 = vmul.f32 %v509, %v508
  %v511 = vmul.f32 0.5, %v510
  %v512 = vsub.f32 1.5, %v511
  %v513 = vmul.f32 %v508, %v512
  %vm514 = vweird.f32 %v504
  %vm515 = vweird.f32 %v508
  %vm516 = vmor %vm514, %vm515
  %v517 = vsel %vm516, %v508, %v513
  %v518 = vrsqrt.pop %v505
  %v519 = vmul.f32 %v518, %v505
  %v520 = vmul.f32 %v519, %v518
  %v521 = vmul.f32 0.5, %v520
  %v522 = vsub.f32 1.5, %v521
  %v523 = vmul.f32 %v518, %v522
  %vm524 = vweird.f32 %v505
  %vm525 = vweird.f32 %v518
  %vm526 = vmor %vm524, %vm525
  %v527 = vsel %vm526, %v518, %v523
  %v528 = vrsqrt.pop %v506
  %v529 = vmul.f32 %v528, %v506
  %v530 = vmul.f32 %v529, %v528
  %v531 = vmul.f32 0.5, %v530
  %v532 = vsub.f32 1.5, %v531
  %v533 = vmul.f32 %v528, %v532
  %vm534 = vweird.f32 %v506
  %vm535 = vweird.f32 %v528
  %vm536 = vmor %vm534, %vm535
  %v537 = vsel %vm536, %v528, %v533
  %v538 = vrsqrt.pop %v507
  %v539 = vmul.f32 %v538, %v507
  %v540 = vmul.f32 %v539, %v538
  %v541 = vmul.f32 0.5, %v540
  %v542 = vsub.f32 1.5, %v541
  %v543 = vmul.f32 %v538, %v542
  %vm544 = vweird.f32 %v507
  %vm545 = vweird.f32 %v538
  %vm546 = vmor %vm544, %vm545
  %v547 = vsel %vm546, %v538, %v543
  %v548 = vmul.f32 %v464, %v517
  %v549 = vmul.f32 %v465, %v527
  %v550 = vmul.f32 %v466, %v537
  %v551 = vmul.f32 %v467, %v547
  %v552 = vperm.slane %v36, 3
  %554 = vrot.lane.b32.xlu0 %v552, 96
  %v555 = vpop.permute.xlu0 %554
  %v557 = vmul.f32 %v548, %v555
  %v558 = vmul.f32 %v549, %v555
  %v559 = vmul.f32 %v550, %v555
  %v560 = vmul.f32 %v551, %v555
  %v561 = vperm.slane %v36, 4
  %563 = vrot.lane.b32.xlu0 %v561, 96
  %v564 = vpop.permute.xlu0 %563
  %v566 = vadd.f32 %v557, %v564
  %v567 = vadd.f32 %v558, %v564
  %v568 = vadd.f32 %v559, %v564
  %v569 = vadd.f32 %v560, %v564
  %v570 = vmax.f32 %v566, 0.0
  %v571 = vmax.f32 %v567, 0.0
  %v572 = vmax.f32 %v568, 0.0
  %v573 = vmax.f32 %v569, 0.0
  %v574 = vld [vmem:[%s3] sm:$0xff]
  %v575 = vld [vmem:[%s3 + $0x8] sm:$0xff]
  %v576 = vld [vmem:[%s3 + $0x10] sm:$0xff]
  %v577 = vld [vmem:[%s3 + $0x18] sm:$0xff]
  %v578 = vld [vmem:[%s3 + $0x20] sm:$0xff]
  %v579 = vperm.slane %v578, 0
  %584 = vrot.lane.b32.xlu0 %v570, 32
  %v585 = vpop.permute.xlu0 %584
  %586 = vrot.lane.b32.xlu0 %v571, 32
  %v587 = vpop.permute.xlu0 %586
  %588 = vrot.lane.b32.xlu0 %v572, 32
  %v589 = vpop.permute.xlu0 %588
  %590 = vrot.lane.b32.xlu0 %v573, 32
  %v591 = vpop.permute.xlu0 %590
  %v592 = vsel %vm92, %v585, 0
  %v594 = vsel %vm92, %v587, 0
  %v596 = vsel %vm92, %v589, 0
  %v598 = vsel %vm92, %v591, 0
  %600 = vmatpush.msra.mxu0 0.0
  %601 = vmatpush.msra.mxu0 0.0
  %602 = vmatpush.msra.mxu0 0.0
  %603 = vmatpush.msra.mxu0 0.0
  %604 = vmatpush.msra.mxu0 0.0
  %605 = vmatpush.msra.mxu0 0.0
  %606 = vmatpush.msra.mxu0 0.0
  %607 = vmatpush.msra.mxu0 0.0
  %608 = vmatpush.msra.mxu0 0.0
  %609 = vmatpush.msra.mxu0 0.0
  %610 = vmatpush.msra.mxu0 0.0
  %611 = vmatpush.msra.mxu0 0.0
  %612 = vmatpush.msra.mxu0 %v577
  %613 = vmatpush.msra.mxu0 %v576
  %614 = vmatpush.msra.mxu0 %v575
  %615 = vmatpush.msra.mxu0 %v574
  %616 = vmatmul.f32.gmra.mxu0 %v592
  %v617 = vpop.f32.mrf.mxu0
  %v618 = vadd.f32 %v579, %v617
  %619 = vmatmul.f32.gmra.mxu0 %v594
  %v620 = vpop.f32.mrf.mxu0
  %v621 = vadd.f32 %v579, %v620
  %622 = vmatmul.f32.gmra.mxu0 %v596
  %v623 = vpop.f32.mrf.mxu0
  %v624 = vadd.f32 %v579, %v623
  %625 = vmatmul.f32.gmra.mxu0 %v598
  %v626 = vpop.f32.mrf.mxu0
  %v627 = vadd.f32 %v579, %v626
  %628 = vdwg.mxu0
  %633 = vrot.lane.b32.xlu0 %v618, 96
  %v634 = vpop.permute.xlu0 %633
  %635 = vrot.lane.b32.xlu0 %v621, 96
  %v636 = vpop.permute.xlu0 %635
  %637 = vrot.lane.b32.xlu0 %v624, 96
  %v638 = vpop.permute.xlu0 %637
  %639 = vrot.lane.b32.xlu0 %v627, 96
  %v640 = vpop.permute.xlu0 %639
  %v641 = vsel %vm92, %v618, 0
  %v643 = vsel %vm92, %v621, 0
  %v645 = vsel %vm92, %v624, 0
  %v647 = vsel %vm92, %v627, 0
  %v649 = vsel %vm92, %v634, 0
  %v651 = vsel %vm92, %v636, 0
  %v653 = vsel %vm92, %v638, 0
  %v655 = vsel %vm92, %v640, 0
  %657 = vmatpush.xpose.msra.mxu0 0.0
  %658 = vmatpush.xpose.msra.mxu0 0.0
  %659 = vmatpush.xpose.msra.mxu0 0.0
  %660 = vmatpush.xpose.msra.mxu0 0.0
  %661 = vmatpush.xpose.msra.mxu0 0.0
  %662 = vmatpush.xpose.msra.mxu0 0.0
  %663 = vmatpush.xpose.msra.mxu0 0.0
  %664 = vmatpush.xpose.msra.mxu0 0.0
  %665 = vmatpush.xpose.msra.mxu0 0.0
  %666 = vmatpush.xpose.msra.mxu0 0.0
  %667 = vmatpush.xpose.msra.mxu0 0.0
  %668 = vmatpush.xpose.msra.mxu0 0.0
  %669 = vmatpush.xpose.msra.mxu0 %v655
  %670 = vmatpush.xpose.msra.mxu0 %v653
  %671 = vmatpush.xpose.msra.mxu0 %v651
  %672 = vmatpush.xpose.msra.mxu0 %v649
  %673 = vmatmul.f32.gmra.mxu0 %v641
  %v674 = vpop.f32.mrf.mxu0
  %v675 = vadd.f32 0.0, %v674
  %676 = vmatmul.f32.gmra.mxu0 %v643
  %v677 = vpop.f32.mrf.mxu0
  %v678 = vadd.f32 0.0, %v677
  %679 = vmatmul.f32.gmra.mxu0 %v645
  %v680 = vpop.f32.mrf.mxu0
  %v681 = vadd.f32 0.0, %v680
  %682 = vmatmul.f32.gmra.mxu0 %v647
  %v683 = vpop.f32.mrf.mxu0
  %v684 = vadd.f32 0.0, %v683
  %685 = vdwg.mxu0
  %v686 = vmul.f32 %v675, 0.17677669
  %v687 = vmul.f32 %v678, 0.17677669
  %v688 = vmul.f32 %v681, 0.17677669
  %v689 = vmul.f32 %v684, 0.17677669
  %v690 = vsel %vm142, %v686, -1e+30
  %v691 = vsel %vm143, %v687, -1e+30
  %v692 = vsel %vm144, %v688, -1e+30
  %v693 = vsel %vm145, %v689, -1e+30
  %v694 = vsel %vm92, %v690, -inf
  %695 = vmax.xlane.f32.xlu0 %v694
  %v696 = vpop.xlane.xlu0 %695
  %v697 = vsel %vm92, %v691, -inf
  %698 = vmax.xlane.f32.xlu0 %v697
  %v699 = vpop.xlane.xlu0 %698
  %v700 = vsel %vm92, %v692, -inf
  %701 = vmax.xlane.f32.xlu0 %v700
  %v702 = vpop.xlane.xlu0 %701
  %v703 = vsel %vm92, %v693, -inf
  %704 = vmax.xlane.f32.xlu0 %v703
  %v705 = vpop.xlane.xlu0 %704
  %vm706 = vcmp.le.f32.partialorder %v696, -5e+29
  %vm707 = vcmp.le.f32.partialorder %v699, -5e+29
  %vm708 = vcmp.le.f32.partialorder %v702, -5e+29
  %vm709 = vcmp.le.f32.partialorder %v705, -5e+29
  %v710 = vsel %vm706, 0.0, %v696
  %v711 = vsel %vm707, 0.0, %v699
  %v712 = vsel %vm708, 0.0, %v702
  %v713 = vsel %vm709, 0.0, %v705
  %v714 = vsub.f32 %v686, %v710
  %v715 = vsub.f32 %v687, %v711
  %v716 = vsub.f32 %v688, %v712
  %v717 = vsub.f32 %v689, %v713
  %v718 = vmin.f32 %v714, 60.0
  %v719 = vmin.f32 %v715, 60.0
  %v720 = vmin.f32 %v716, 60.0
  %v721 = vmin.f32 %v717, 60.0
  %v722 = vmul.f32 %v718, 1.442695
  %v723 = vpow.pop %v722
  %v724 = vmul.f32 %v719, 1.442695
  %v725 = vpow.pop %v724
  %v726 = vmul.f32 %v720, 1.442695
  %v727 = vpow.pop %v726
  %v728 = vmul.f32 %v721, 1.442695
  %v729 = vpow.pop %v728
  %v730 = vmul.f32 %v723, %v30
  %v731 = vmul.f32 %v725, %v31
  %v732 = vmul.f32 %v727, %v32
  %v733 = vmul.f32 %v729, %v33
  %v734 = vsel %vm92, %v730, 0.0
  %735 = vadd.xlane.f32.xlu0 %v734
  %v736 = vpop.xlane.xlu0 %735
  %v737 = vsel %vm92, %v731, 0.0
  %738 = vadd.xlane.f32.xlu0 %v737
  %v739 = vpop.xlane.xlu0 %738
  %v740 = vsel %vm92, %v732, 0.0
  %741 = vadd.xlane.f32.xlu0 %v740
  %v742 = vpop.xlane.xlu0 %741
  %v743 = vsel %vm92, %v733, 0.0
  %744 = vadd.xlane.f32.xlu0 %v743
  %v745 = vpop.xlane.xlu0 %744
  %vm746 = vcmp.eq.f32.partialorder %v736, 0.0
  %vm747 = vcmp.eq.f32.partialorder %v739, 0.0
  %vm748 = vcmp.eq.f32.partialorder %v742, 0.0
  %vm749 = vcmp.eq.f32.partialorder %v745, 0.0
  %v750 = vsel %vm746, 1.0, %v736
  %v751 = vsel %vm747, 1.0, %v739
  %v752 = vsel %vm748, 1.0, %v742
  %v753 = vsel %vm749, 1.0, %v745
  %v754 = vrcp.pop %v750
  %v755 = vrcp.pop %v751
  %v756 = vrcp.pop %v752
  %v757 = vrcp.pop %v753
  %v758 = vmul.f32 %v730, %v754
  %v759 = vmul.f32 %v731, %v755
  %v760 = vmul.f32 %v732, %v756
  %v761 = vmul.f32 %v733, %v757
  %762 = vrot.lane.b32.xlu0 %v618, 64
  %v763 = vpop.permute.xlu0 %762
  %764 = vrot.lane.b32.xlu0 %v621, 64
  %v765 = vpop.permute.xlu0 %764
  %766 = vrot.lane.b32.xlu0 %v624, 64
  %v767 = vpop.permute.xlu0 %766
  %768 = vrot.lane.b32.xlu0 %v627, 64
  %v769 = vpop.permute.xlu0 %768
  %v775 = vsel %vm92, %v758, 0
  %v778 = vsel %vm92, %v759, 0
  %v781 = vsel %vm92, %v760, 0
  %v784 = vsel %vm92, %v761, 0
  %786 = vmatpush.msra.mxu0 0.0
  %787 = vmatpush.msra.mxu0 0.0
  %788 = vmatpush.msra.mxu0 0.0
  %789 = vmatpush.msra.mxu0 0.0
  %790 = vmatpush.msra.mxu0 0.0
  %791 = vmatpush.msra.mxu0 0.0
  %792 = vmatpush.msra.mxu0 0.0
  %793 = vmatpush.msra.mxu0 0.0
  %794 = vmatpush.msra.mxu0 0.0
  %795 = vmatpush.msra.mxu0 0.0
  %796 = vmatpush.msra.mxu0 0.0
  %797 = vmatpush.msra.mxu0 0.0
  %798 = vmatpush.msra.mxu0 %v769
  %799 = vmatpush.msra.mxu0 %v767
  %800 = vmatpush.msra.mxu0 %v765
  %801 = vmatpush.msra.mxu0 %v763
  %802 = vmatmul.f32.gmra.mxu0 %v775
  %v803 = vpop.f32.mrf.mxu0
  %v804 = vadd.f32 0.0, %v803
  %805 = vmatmul.f32.gmra.mxu0 %v778
  %v806 = vpop.f32.mrf.mxu0
  %v807 = vadd.f32 0.0, %v806
  %808 = vmatmul.f32.gmra.mxu0 %v781
  %v809 = vpop.f32.mrf.mxu0
  %v810 = vadd.f32 0.0, %v809
  %811 = vmatmul.f32.gmra.mxu0 %v784
  %v812 = vpop.f32.mrf.mxu0
  %v813 = vadd.f32 0.0, %v812
  %814 = vdwg.mxu0
  %v815 = vperm.slane %v578, 1
  %v816 = vmul.f32 %v804, %v815
  %v817 = vmul.f32 %v807, %v815
  %v818 = vmul.f32 %v810, %v815
  %v819 = vmul.f32 %v813, %v815
  %v820 = vperm.slane %v578, 2
  %822 = vrot.lane.b32.xlu0 %v820, 96
  %v823 = vpop.permute.xlu0 %822
  %v825 = vmul.f32 %v618, %v823
  %v826 = vmul.f32 %v621, %v823
  %v827 = vmul.f32 %v624, %v823
  %v828 = vmul.f32 %v627, %v823
  %833 = vrot.lane.b32.xlu0 %v825, 32
  %v834 = vpop.permute.xlu0 %833
  %835 = vrot.lane.b32.xlu0 %v826, 32
  %v836 = vpop.permute.xlu0 %835
  %837 = vrot.lane.b32.xlu0 %v827, 32
  %v838 = vpop.permute.xlu0 %837
  %839 = vrot.lane.b32.xlu0 %v828, 32
  %v840 = vpop.permute.xlu0 %839
  %v845 = vadd.f32 %v816, %v834
  %v846 = vadd.f32 %v817, %v836
  %v847 = vadd.f32 %v818, %v838
  %v848 = vadd.f32 %v819, %v840
  %v849 = vsel %vm92, %v845, 0.0
  %850 = vadd.xlane.f32.xlu0 %v849
  %v851 = vpop.xlane.xlu0 %850
  %v852 = vsel %vm92, %v846, 0.0
  %853 = vadd.xlane.f32.xlu0 %v852
  %v854 = vpop.xlane.xlu0 %853
  %v855 = vsel %vm92, %v847, 0.0
  %856 = vadd.xlane.f32.xlu0 %v855
  %v857 = vpop.xlane.xlu0 %856
  %v858 = vsel %vm92, %v848, 0.0
  %859 = vadd.xlane.f32.xlu0 %v858
  %v860 = vpop.xlane.xlu0 %859
  %v861 = vxor.u32 %v851, 2147483648
  %v862 = vxor.u32 %v854, 2147483648
  %v863 = vxor.u32 %v857, 2147483648
  %v864 = vxor.u32 %v860, 2147483648
  %v865 = vmul.f32 %v861, 1.442695
  %v866 = vpow.pop %v865
  %v867 = vmul.f32 %v862, 1.442695
  %v868 = vpow.pop %v867
  %v869 = vmul.f32 %v863, 1.442695
  %v870 = vpow.pop %v869
  %v871 = vmul.f32 %v864, 1.442695
  %v872 = vpow.pop %v871
  %v873 = vadd.f32 %v866, 1.0
  %v874 = vadd.f32 %v868, 1.0
  %v875 = vadd.f32 %v870, 1.0
  %v876 = vadd.f32 %v872, 1.0
  %v877 = vrcp.pop %v873
  %v878 = vmul.f32 %v873, %v877
  %v879 = vsub.f32 1.0, %v878
  %v880 = vmul.f32 %v877, %v879
  %v881 = vadd.f32 %v877, %v880
  %vm882 = vweird.f32 %v873
  %vm883 = vweird.f32 %v877
  %vm884 = vmor %vm882, %vm883
  %v885 = vsel %vm884, %v877, %v881
  %v886 = vand.u32 2147483647, %v873
  %vm887 = vcmp.eq.f32.partialorder %v886, 8.507059e+37
  %v888 = vand.u32 %v873, 2147483648
  %v889 = vor.u32 1.1754944e-38, %v888
  %v890 = vsel %vm887, %v889, %v885
  %v891 = vmul.f32 1.0, %v890
  %v892 = vrcp.pop %v874
  %v893 = vmul.f32 %v874, %v892
  %v894 = vsub.f32 1.0, %v893
  %v895 = vmul.f32 %v892, %v894
  %v896 = vadd.f32 %v892, %v895
  %vm897 = vweird.f32 %v874
  %vm898 = vweird.f32 %v892
  %vm899 = vmor %vm897, %vm898
  %v900 = vsel %vm899, %v892, %v896
  %v901 = vand.u32 2147483647, %v874
  %vm902 = vcmp.eq.f32.partialorder %v901, 8.507059e+37
  %v903 = vand.u32 %v874, 2147483648
  %v904 = vor.u32 1.1754944e-38, %v903
  %v905 = vsel %vm902, %v904, %v900
  %v906 = vmul.f32 1.0, %v905
  %v907 = vrcp.pop %v875
  %v908 = vmul.f32 %v875, %v907
  %v909 = vsub.f32 1.0, %v908
  %v910 = vmul.f32 %v907, %v909
  %v911 = vadd.f32 %v907, %v910
  %vm912 = vweird.f32 %v875
  %vm913 = vweird.f32 %v907
  %vm914 = vmor %vm912, %vm913
  %v915 = vsel %vm914, %v907, %v911
  %v916 = vand.u32 2147483647, %v875
  %vm917 = vcmp.eq.f32.partialorder %v916, 8.507059e+37
  %v918 = vand.u32 %v875, 2147483648
  %v919 = vor.u32 1.1754944e-38, %v918
  %v920 = vsel %vm917, %v919, %v915
  %v921 = vmul.f32 1.0, %v920
  %v922 = vrcp.pop %v876
  %v923 = vmul.f32 %v876, %v922
  %v924 = vsub.f32 1.0, %v923
  %v925 = vmul.f32 %v922, %v924
  %v926 = vadd.f32 %v922, %v925
  %vm927 = vweird.f32 %v876
  %vm928 = vweird.f32 %v922
  %vm929 = vmor %vm927, %vm928
  %v930 = vsel %vm929, %v922, %v926
  %v931 = vand.u32 2147483647, %v876
  %vm932 = vcmp.eq.f32.partialorder %v931, 8.507059e+37
  %v933 = vand.u32 %v876, 2147483648
  %v934 = vor.u32 1.1754944e-38, %v933
  %v935 = vsel %vm932, %v934, %v930
  %v936 = vmul.f32 1.0, %v935
  %v937 = vmul.f32 %v891, %v618
  %v938 = vmul.f32 %v906, %v621
  %v939 = vmul.f32 %v921, %v624
  %v940 = vmul.f32 %v936, %v627
  %v941 = vsub.f32 1.0, %v891
  %v942 = vsub.f32 1.0, %v906
  %v943 = vsub.f32 1.0, %v921
  %v944 = vsub.f32 1.0, %v936
  %v945 = vmul.f32 %v941, %v804
  %v946 = vmul.f32 %v942, %v807
  %v947 = vmul.f32 %v943, %v810
  %v948 = vmul.f32 %v944, %v813
  %953 = vrot.lane.b32.xlu0 %v945, 96
  %v954 = vpop.permute.xlu0 %953
  %955 = vrot.lane.b32.xlu0 %v946, 96
  %v956 = vpop.permute.xlu0 %955
  %957 = vrot.lane.b32.xlu0 %v947, 96
  %v958 = vpop.permute.xlu0 %957
  %959 = vrot.lane.b32.xlu0 %v948, 96
  %v960 = vpop.permute.xlu0 %959
  %v965 = vadd.f32 %v937, %v954
  %v966 = vadd.f32 %v938, %v956
  %v967 = vadd.f32 %v939, %v958
  %v968 = vadd.f32 %v940, %v960
  %973 = vrot.lane.b32.xlu0 %v965, 32
  %v974 = vpop.permute.xlu0 %973
  %975 = vrot.lane.b32.xlu0 %v966, 32
  %v976 = vpop.permute.xlu0 %975
  %977 = vrot.lane.b32.xlu0 %v967, 32
  %v978 = vpop.permute.xlu0 %977
  %979 = vrot.lane.b32.xlu0 %v968, 32
  %v980 = vpop.permute.xlu0 %979
  %v985 = vsel %vm92, %v974, 0.0
  %986 = vadd.xlane.f32.xlu0 %v985
  %v987 = vpop.xlane.xlu0 %986
  %v988 = vsel %vm92, %v976, 0.0
  %989 = vadd.xlane.f32.xlu0 %v988
  %v990 = vpop.xlane.xlu0 %989
  %v991 = vsel %vm92, %v978, 0.0
  %992 = vadd.xlane.f32.xlu0 %v991
  %v993 = vpop.xlane.xlu0 %992
  %v994 = vsel %vm92, %v980, 0.0
  %995 = vadd.xlane.f32.xlu0 %v994
  %v996 = vpop.xlane.xlu0 %995
  %v997 = vmul.f32 %v987, %v459
  %v998 = vmul.f32 %v990, %v459
  %v999 = vmul.f32 %v993, %v459
  %v1000 = vmul.f32 %v996, %v459
  %v1001 = vsub.f32 %v965, %v997
  %v1002 = vsub.f32 %v966, %v998
  %v1003 = vsub.f32 %v967, %v999
  %v1004 = vsub.f32 %v968, %v1000
  %v1005 = vmul.f32 %v1001, %v1001
  %v1006 = vmul.f32 %v1002, %v1002
  %v1007 = vmul.f32 %v1003, %v1003
  %v1008 = vmul.f32 %v1004, %v1004
  %1013 = vrot.lane.b32.xlu0 %v1005, 32
  %v1014 = vpop.permute.xlu0 %1013
  %1015 = vrot.lane.b32.xlu0 %v1006, 32
  %v1016 = vpop.permute.xlu0 %1015
  %1017 = vrot.lane.b32.xlu0 %v1007, 32
  %v1018 = vpop.permute.xlu0 %1017
  %1019 = vrot.lane.b32.xlu0 %v1008, 32
  %v1020 = vpop.permute.xlu0 %1019
  %v1025 = vsel %vm92, %v1014, 0.0
  %1026 = vadd.xlane.f32.xlu0 %v1025
  %v1027 = vpop.xlane.xlu0 %1026
  %v1028 = vsel %vm92, %v1016, 0.0
  %1029 = vadd.xlane.f32.xlu0 %v1028
  %v1030 = vpop.xlane.xlu0 %1029
  %v1031 = vsel %vm92, %v1018, 0.0
  %1032 = vadd.xlane.f32.xlu0 %v1031
  %v1033 = vpop.xlane.xlu0 %1032
  %v1034 = vsel %vm92, %v1020, 0.0
  %1035 = vadd.xlane.f32.xlu0 %v1034
  %v1036 = vpop.xlane.xlu0 %1035
  %v1037 = vmul.f32 %v1027, %v459
  %v1038 = vmul.f32 %v1030, %v459
  %v1039 = vmul.f32 %v1033, %v459
  %v1040 = vmul.f32 %v1036, %v459
  %v1041 = vadd.f32 %v1037, 1e-05
  %v1042 = vadd.f32 %v1038, 1e-05
  %v1043 = vadd.f32 %v1039, 1e-05
  %v1044 = vadd.f32 %v1040, 1e-05
  %v1045 = vrsqrt.pop %v1041
  %v1046 = vmul.f32 %v1045, %v1041
  %v1047 = vmul.f32 %v1046, %v1045
  %v1048 = vmul.f32 0.5, %v1047
  %v1049 = vsub.f32 1.5, %v1048
  %v1050 = vmul.f32 %v1045, %v1049
  %vm1051 = vweird.f32 %v1041
  %vm1052 = vweird.f32 %v1045
  %vm1053 = vmor %vm1051, %vm1052
  %v1054 = vsel %vm1053, %v1045, %v1050
  %v1055 = vrsqrt.pop %v1042
  %v1056 = vmul.f32 %v1055, %v1042
  %v1057 = vmul.f32 %v1056, %v1055
  %v1058 = vmul.f32 0.5, %v1057
  %v1059 = vsub.f32 1.5, %v1058
  %v1060 = vmul.f32 %v1055, %v1059
  %vm1061 = vweird.f32 %v1042
  %vm1062 = vweird.f32 %v1055
  %vm1063 = vmor %vm1061, %vm1062
  %v1064 = vsel %vm1063, %v1055, %v1060
  %v1065 = vrsqrt.pop %v1043
  %v1066 = vmul.f32 %v1065, %v1043
  %v1067 = vmul.f32 %v1066, %v1065
  %v1068 = vmul.f32 0.5, %v1067
  %v1069 = vsub.f32 1.5, %v1068
  %v1070 = vmul.f32 %v1065, %v1069
  %vm1071 = vweird.f32 %v1043
  %vm1072 = vweird.f32 %v1065
  %vm1073 = vmor %vm1071, %vm1072
  %v1074 = vsel %vm1073, %v1065, %v1070
  %v1075 = vrsqrt.pop %v1044
  %v1076 = vmul.f32 %v1075, %v1044
  %v1077 = vmul.f32 %v1076, %v1075
  %v1078 = vmul.f32 0.5, %v1077
  %v1079 = vsub.f32 1.5, %v1078
  %v1080 = vmul.f32 %v1075, %v1079
  %vm1081 = vweird.f32 %v1044
  %vm1082 = vweird.f32 %v1075
  %vm1083 = vmor %vm1081, %vm1082
  %v1084 = vsel %vm1083, %v1075, %v1080
  %v1085 = vmul.f32 %v1001, %v1054
  %v1086 = vmul.f32 %v1002, %v1064
  %v1087 = vmul.f32 %v1003, %v1074
  %v1088 = vmul.f32 %v1004, %v1084
  %v1089 = vperm.slane %v578, 3
  %1091 = vrot.lane.b32.xlu0 %v1089, 96
  %v1092 = vpop.permute.xlu0 %1091
  %v1094 = vmul.f32 %v1085, %v1092
  %v1095 = vmul.f32 %v1086, %v1092
  %v1096 = vmul.f32 %v1087, %v1092
  %v1097 = vmul.f32 %v1088, %v1092
  %v1098 = vperm.slane %v578, 4
  %1100 = vrot.lane.b32.xlu0 %v1098, 96
  %v1101 = vpop.permute.xlu0 %1100
  %v1103 = vadd.f32 %v1094, %v1101
  %v1104 = vadd.f32 %v1095, %v1101
  %v1105 = vadd.f32 %v1096, %v1101
  %v1106 = vadd.f32 %v1097, %v1101
  %v1107 = vmax.f32 %v1103, 0.0
  %v1108 = vmax.f32 %v1104, 0.0
  %v1109 = vmax.f32 %v1105, 0.0
  %v1110 = vmax.f32 %v1106, 0.0
  %v1111 = vadd.f32 %v1107, %v570
  %v1112 = vadd.f32 %v1108, %v571
  %v1113 = vadd.f32 %v1109, %v572
  %v1114 = vadd.f32 %v1110, %v573
  %v1115 = vld [vmem:[%s4] sm:$0xff]
  %v1116 = vld [vmem:[%s4 + $0x8] sm:$0xff]
  %v1117 = vld [vmem:[%s4 + $0x10] sm:$0xff]
  %v1118 = vld [vmem:[%s4 + $0x18] sm:$0xff]
  %v1119 = vld [vmem:[%s4 + $0x20] sm:$0xff]
  %v1120 = vperm.slane %v1119, 0
  %1125 = vrot.lane.b32.xlu0 %v1111, 32
  %v1126 = vpop.permute.xlu0 %1125
  %1127 = vrot.lane.b32.xlu0 %v1112, 32
  %v1128 = vpop.permute.xlu0 %1127
  %1129 = vrot.lane.b32.xlu0 %v1113, 32
  %v1130 = vpop.permute.xlu0 %1129
  %1131 = vrot.lane.b32.xlu0 %v1114, 32
  %v1132 = vpop.permute.xlu0 %1131
  %v1133 = vsel %vm92, %v1126, 0
  %v1135 = vsel %vm92, %v1128, 0
  %v1137 = vsel %vm92, %v1130, 0
  %v1139 = vsel %vm92, %v1132, 0
  %1141 = vmatpush.msra.mxu0 0.0
  %1142 = vmatpush.msra.mxu0 0.0
  %1143 = vmatpush.msra.mxu0 0.0
  %1144 = vmatpush.msra.mxu0 0.0
  %1145 = vmatpush.msra.mxu0 0.0
  %1146 = vmatpush.msra.mxu0 0.0
  %1147 = vmatpush.msra.mxu0 0.0
  %1148 = vmatpush.msra.mxu0 0.0
  %1149 = vmatpush.msra.mxu0 0.0
  %1150 = vmatpush.msra.mxu0 0.0
  %1151 = vmatpush.msra.mxu0 0.0
  %1152 = vmatpush.msra.mxu0 0.0
  %1153 = vmatpush.msra.mxu0 %v1118
  %1154 = vmatpush.msra.mxu0 %v1117
  %1155 = vmatpush.msra.mxu0 %v1116
  %1156 = vmatpush.msra.mxu0 %v1115
  %1157 = vmatmul.f32.gmra.mxu0 %v1133
  %v1158 = vpop.f32.mrf.mxu0
  %v1159 = vadd.f32 %v1120, %v1158
  %1160 = vmatmul.f32.gmra.mxu0 %v1135
  %v1161 = vpop.f32.mrf.mxu0
  %v1162 = vadd.f32 %v1120, %v1161
  %1163 = vmatmul.f32.gmra.mxu0 %v1137
  %v1164 = vpop.f32.mrf.mxu0
  %v1165 = vadd.f32 %v1120, %v1164
  %1166 = vmatmul.f32.gmra.mxu0 %v1139
  %v1167 = vpop.f32.mrf.mxu0
  %v1168 = vadd.f32 %v1120, %v1167
  %1169 = vdwg.mxu0
  %v1170 = vmax.f32 %v1159, 0.0
  %v1171 = vmax.f32 %v1162, 0.0
  %v1172 = vmax.f32 %v1165, 0.0
  %v1173 = vmax.f32 %v1168, 0.0
  %v1174 = vld [vmem:[%s5] sm:$0xff]
  %v1175 = vld [vmem:[%s5 + $0x8] sm:$0xff]
  %v1176 = vld [vmem:[%s5 + $0x10] sm:$0xff]
  %v1177 = vld [vmem:[%s5 + $0x18] sm:$0xff]
  %v1178 = vld [vmem:[%s5 + $0x20] sm:$0xff]
  %v1179 = vld [vmem:[%s5 + $0x28] sm:$0xff]
  %v1180 = vld [vmem:[%s5 + $0x30] sm:$0xff]
  %v1181 = vld [vmem:[%s5 + $0x38] sm:$0xff]
  %v1182 = vld [vmem:[%s5 + $0x40] sm:$0xff]
  %v1183 = vperm.slane %v1182, 0
  %vm1184 = vcmask 523264
  %v1186 = vsel %vm1184, %v1170, 0
  %v1189 = vsel %vm1184, %v1171, 0
  %v1192 = vsel %vm1184, %v1172, 0
  %v1195 = vsel %vm1184, %v1173, 0
  %1197 = vmatpush.msra.mxu0 0.0
  %1198 = vmatpush.msra.mxu0 0.0
  %1199 = vmatpush.msra.mxu0 0.0
  %1200 = vmatpush.msra.mxu0 0.0
  %1201 = vmatpush.msra.mxu0 0.0
  %1202 = vmatpush.msra.mxu0 0.0
  %1203 = vmatpush.msra.mxu0 0.0
  %1204 = vmatpush.msra.mxu0 0.0
  %1205 = vmatpush.msra.mxu0 %v1181
  %1206 = vmatpush.msra.mxu0 %v1180
  %1207 = vmatpush.msra.mxu0 %v1179
  %1208 = vmatpush.msra.mxu0 %v1178
  %1209 = vmatpush.msra.mxu0 %v1177
  %1210 = vmatpush.msra.mxu0 %v1176
  %1211 = vmatpush.msra.mxu0 %v1175
  %1212 = vmatpush.msra.mxu0 %v1174
  %1213 = vmatmul.f32.gmra.mxu0 %v1186
  %v1214 = vpop.f32.mrf.mxu0
  %v1215 = vadd.f32 %v1183, %v1214
  %1216 = vmatmul.f32.gmra.mxu0 %v1189
  %v1217 = vpop.f32.mrf.mxu0
  %v1218 = vadd.f32 %v1183, %v1217
  %1219 = vmatmul.f32.gmra.mxu0 %v1192
  %v1220 = vpop.f32.mrf.mxu0
  %v1221 = vadd.f32 %v1183, %v1220
  %1222 = vmatmul.f32.gmra.mxu0 %v1195
  %v1223 = vpop.f32.mrf.mxu0
  %v1224 = vadd.f32 %v1183, %v1223
  %1225 = vdwg.mxu0
  %v1226 = vmax.f32 %v1215, 0.0
  %v1227 = vmax.f32 %v1218, 0.0
  %v1228 = vmax.f32 %v1221, 0.0
  %v1229 = vmax.f32 %v1224, 0.0
  %v1230 = vld [vmem:[%s6] sm:$0xff]
  %v1231 = vld [vmem:[%s6 + $0x8] sm:$0xff]
  %v1232 = vld [vmem:[%s6 + $0x10] sm:$0xff]
  %v1233 = vld [vmem:[%s6 + $0x18] sm:$0xff]
  %v1234 = vld [vmem:[%s6 + $0x20] sm:$0xff]
  %v1235 = vld [vmem:[%s6 + $0x28] sm:$0xff]
  %v1236 = vld [vmem:[%s6 + $0x30] sm:$0xff]
  %v1237 = vld [vmem:[%s6 + $0x38] sm:$0xff]
  %v1238 = vld [vmem:[%s6 + $0x40] sm:$0xff]
  %v1239 = vperm.slane %v1238, 0
  %v1241 = vsel %vm1184, %v1226, 0
  %v1244 = vsel %vm1184, %v1227, 0
  %v1247 = vsel %vm1184, %v1228, 0
  %v1250 = vsel %vm1184, %v1229, 0
  %1252 = vmatpush.msra.mxu0 0.0
  %1253 = vmatpush.msra.mxu0 0.0
  %1254 = vmatpush.msra.mxu0 0.0
  %1255 = vmatpush.msra.mxu0 0.0
  %1256 = vmatpush.msra.mxu0 0.0
  %1257 = vmatpush.msra.mxu0 0.0
  %1258 = vmatpush.msra.mxu0 0.0
  %1259 = vmatpush.msra.mxu0 0.0
  %1260 = vmatpush.msra.mxu0 %v1237
  %1261 = vmatpush.msra.mxu0 %v1236
  %1262 = vmatpush.msra.mxu0 %v1235
  %1263 = vmatpush.msra.mxu0 %v1234
  %1264 = vmatpush.msra.mxu0 %v1233
  %1265 = vmatpush.msra.mxu0 %v1232
  %1266 = vmatpush.msra.mxu0 %v1231
  %1267 = vmatpush.msra.mxu0 %v1230
  %1268 = vmatmul.f32.gmra.mxu0 %v1241
  %v1269 = vpop.f32.mrf.mxu0
  %v1270 = vadd.f32 %v1239, %v1269
  %1271 = vmatmul.f32.gmra.mxu0 %v1244
  %v1272 = vpop.f32.mrf.mxu0
  %v1273 = vadd.f32 %v1239, %v1272
  %1274 = vmatmul.f32.gmra.mxu0 %v1247
  %v1275 = vpop.f32.mrf.mxu0
  %v1276 = vadd.f32 %v1239, %v1275
  %1277 = vmatmul.f32.gmra.mxu0 %v1250
  %v1278 = vpop.f32.mrf.mxu0
  %v1279 = vadd.f32 %v1239, %v1278
  %1280 = vdwg.mxu0
  %vm1281 = vcmask 64512
  %1282 = vst.msk [vmem:[%s7] sm:$0xff] %vm1281, %v1270
  %1283 = vst.msk [vmem:[%s7 + $0x8] sm:$0xff] %vm1281, %v1273
  %1284 = vst.msk [vmem:[%s7 + $0x10] sm:$0xff] %vm1281, %v1276
  %1285 = vst.msk [vmem:[%s7 + $0x18] sm:$0xff] %vm1281, %v1279
  // Predicated region
  $region30: #{tpu_custom_call.1} parent=0 // pred_check
    _
  $region31: #{tpu_custom_call.1} parent=0 // pred_check_branch
    %1287 = sbr.rel (0) target = $region33
  $region32: #{tpu_custom_call.1} parent=0 // pred_region
    _
  $region33: #{tpu_custom_call.1} parent=0 // pred_fallthru
    _
  // Predicated region
  $region34: #{tpu_custom_call.1} parent=0 // pred_check
    _
  $region35: #{tpu_custom_call.1} parent=0 // pred_check_branch
    %1289 = sbr.rel (0) target = $region37
  $region36: #{tpu_custom_call.1} parent=0 // pred_region
    _
  $region37: #{tpu_custom_call.1} parent=0 // pred_fallthru
    _

</llo_original>
